<compile_context>
chip_gen: v7x
topology: tpu7x:2x2x1
jax: 0.10.0
libtpu: 0.0.40
codegen_flags: <defaults>
</compile_context>

<pallas_src>
import functools
import math

import jax
import jax.numpy as jnp
from jax import lax
from jax.experimental import pallas as pl
from jax.experimental.pallas import tpu as pltpu


def _pick_tile(length, target):
    """Largest MXU-friendly tile <= target that divides `length`."""
    for t in (target, 256, 128, 64, 32, 16, 8):
        if t <= length and length % t == 0:
            return t
    return length


# ---------------------------------------------------------------------------
# Fused flash-attention kernel.  One grid step = (batch b, q-tile qi, kv-tile ki).
#   xq_ref:  (1, TQ,  Epad)  bf16   query rows of batch b
#   xkv_ref: (1, TKV, Epad)  bf16   key/value rows of batch b
#   wq/wk/wv/wo_ref: (Epad, Epad) bf16   torch-layout weights (y = x @ W.T)
#   bq/bk/bv/bo_ref: (1, Epad) f32
#   o_ref:   (1, TQ, Epad)   f32    output block (resident across the KV axis)
#   q_scr:   (TQ, Epad)      bf16   projected+scaled queries (head-packed)
#   m_scr/l_scr: (H, TQ, 1)  f32    online-softmax running max / denom
#   acc_scr: (H, TQ, Dh)     f32    online-softmax running numerator
# ---------------------------------------------------------------------------
def _flash_mha_kernel(xq_ref, xkv_ref, wq_ref, wk_ref, wv_ref,
                      bq_ref, bk_ref, bv_ref, wo_ref, bo_ref,
                      o_ref,
                      q_scr, m_scr, l_scr, acc_scr,
                      *, num_heads, head_dim, scale):
    ki = pl.program_id(2)
    n_kv = pl.num_programs(2)
    H, Dh = num_heads, head_dim
    TQ, E_pad = q_scr.shape

    # ---- first KV step of this (b, qi): project Q once, reset flash state ----
    @pl.when(ki == 0)
    def _init():
        xq = xq_ref[0]                                             # (TQ, Epad) bf16
        q = lax.dot_general(xq, wq_ref[...], (((1,), (1,)), ((), ())),
                            preferred_element_type=jnp.float32)    # x @ Wq.T
        q = (q + bq_ref[...]) * scale                              # 1/sqrt(Dh) folded in
        q_scr[...] = q.astype(q_scr.dtype)
        m_scr[...] = jnp.full(m_scr.shape, -jnp.inf, m_scr.dtype)
        l_scr[...] = jnp.zeros(l_scr.shape, l_scr.dtype)
        acc_scr[...] = jnp.zeros(acc_scr.shape, acc_scr.dtype)

    # ---- project K / V for this KV tile (bf16 MXU operands, f32 accumulate) ----
    xkv = xkv_ref[0]                                               # (TKV, Epad) bf16
    k = (lax.dot_general(xkv, wk_ref[...], (((1,), (1,)), ((), ())),
                         preferred_element_type=jnp.float32)
         + bk_ref[...]).astype(jnp.bfloat16)                       # (TKV, Epad)
    v = (lax.dot_general(xkv, wv_ref[...], (((1,), (1,)), ((), ())),
                         preferred_element_type=jnp.float32)
         + bv_ref[...]).astype(jnp.bfloat16)                       # (TKV, Epad)

    # ---- per-head online softmax (static lane slices; no stack/concat) ----
    # Small H -> full unroll; flash state lives in VMEM scratch, not SSA values.
    for h in range(H):
        qh = q_scr[:, h * Dh:(h + 1) * Dh]                         # (TQ, Dh) bf16
        kh = k[:, h * Dh:(h + 1) * Dh]                             # (TKV, Dh) bf16
        vh = v[:, h * Dh:(h + 1) * Dh]                             # (TKV, Dh) bf16

        s = lax.dot_general(qh, kh, (((1,), (1,)), ((), ())),
                            preferred_element_type=jnp.float32)    # (TQ, TKV) f32

        m_prev = m_scr[h]                                          # (TQ, 1)
        m_new = jnp.maximum(m_prev, jnp.max(s, axis=-1, keepdims=True))
        alpha = jnp.exp(m_prev - m_new)
        p = jnp.exp(s - m_new)                                     # f32
        l_scr[h] = alpha * l_scr[h] + jnp.sum(p, axis=-1, keepdims=True)
        acc_scr[h] = alpha * acc_scr[h] + lax.dot_general(
            p.astype(jnp.bfloat16), vh, (((1,), (0,)), ((), ())),
            preferred_element_type=jnp.float32)                    # (TQ, Dh)
        m_scr[h] = m_new

    # ---- last KV step: normalize and accumulate the output projection per head ----
    @pl.when(ki == n_kv - 1)
    def _finalize():
        out = jnp.zeros((TQ, E_pad), jnp.float32)
        for h in range(H):
            ctx = (acc_scr[h] / l_scr[h]).astype(jnp.bfloat16)     # (TQ, Dh)
            wo_h = wo_ref[:, h * Dh:(h + 1) * Dh]                  # (Epad, Dh) bf16
            out = out + lax.dot_general(ctx, wo_h, (((1,), (1,)), ((), ())),
                                        preferred_element_type=jnp.float32)
        o_ref[0] = (out + bo_ref[...]).astype(o_ref.dtype)


def multihead_attention(x, in_proj_w, in_proj_b, out_proj_w, out_proj_b,
                        num_heads):
    """Self-attention forward, semantics of torch.nn.MultiheadAttention (eval).

    x:           (L, N, E)
    in_proj_w:   (3E, E)   torch layout (applied as x @ W.T)
    in_proj_b:   (3E,)
    out_proj_w:  (E, E)
    out_proj_b:  (E,)
    returns      (L, N, E) float32
    """
    L, N, E = x.shape
    H = num_heads
    assert E % H == 0, "embed_dim must be divisible by num_heads"
    Dh = E // H
    scale = 1.0 / math.sqrt(Dh)

    # Lane-dense embedding axis: pad E up to a multiple of 128 lanes.
    E_pad = ((E + 127) // 128) * 128

    # MXU-edge tiles (256 target for v6e/v7x; degrades gracefully for short L).
    TQ = _pick_tile(L, 256)
    TKV = _pick_tile(L, 256)
    n_q, n_kv = L // TQ, L // TKV

    # Split fused in-projection into Wq/Wk/Wv (+biases), pad to Epad, cast to bf16.
    def pad_w(w):
        return jnp.pad(w, ((0, E_pad - E), (0, E_pad - E))).astype(jnp.bfloat16)

    def pad_b(b):
        return jnp.pad(b, (0, E_pad - E)).reshape(1, E_pad).astype(jnp.float32)

    wq, wk, wv = [pad_w(in_proj_w[i * E:(i + 1) * E]) for i in range(3)]
    bq, bk, bv = [pad_b(in_proj_b[i * E:(i + 1) * E]) for i in range(3)]
    wo = pad_w(out_proj_w)
    bo = pad_b(out_proj_b)

    # Batch-major, lane-padded, bf16 activations: each grid step consumes a
    # contiguous lane-dense (T, Epad) tile.
    xb = jnp.pad(jnp.transpose(x, (1, 0, 2)),
                 ((0, 0), (0, 0), (0, E_pad - E))).astype(jnp.bfloat16)

    kernel = functools.partial(_flash_mha_kernel, num_heads=H, head_dim=Dh,
                               scale=scale)
    const2 = lambda b, qi, ki: (0, 0)

    out = pl.pallas_call(
        kernel,
        out_shape=jax.ShapeDtypeStruct((N, L, E_pad), jnp.float32),
        grid=(N, n_q, n_kv),
        in_specs=[
            pl.BlockSpec((1, TQ, E_pad), lambda b, qi, ki: (b, qi, 0)),   # x (query rows)
            pl.BlockSpec((1, TKV, E_pad), lambda b, qi, ki: (b, ki, 0)),  # x (kv rows)
            pl.BlockSpec((E_pad, E_pad), const2),                         # Wq
            pl.BlockSpec((E_pad, E_pad), const2),                         # Wk
            pl.BlockSpec((E_pad, E_pad), const2),                         # Wv
            pl.BlockSpec((1, E_pad), const2),                             # bq
            pl.BlockSpec((1, E_pad), const2),                             # bk
            pl.BlockSpec((1, E_pad), const2),                             # bv
            pl.BlockSpec((E_pad, E_pad), const2),                         # Wo
            pl.BlockSpec((1, E_pad), const2),                             # bo
        ],
        out_specs=pl.BlockSpec((1, TQ, E_pad), lambda b, qi, ki: (b, qi, 0)),
        scratch_shapes=[
            pltpu.VMEM((TQ, E_pad), jnp.bfloat16),   # projected q tile (head-packed)
            pltpu.VMEM((H, TQ, 1), jnp.float32),     # running max
            pltpu.VMEM((H, TQ, 1), jnp.float32),     # running denominator
            pltpu.VMEM((H, TQ, Dh), jnp.float32),    # running numerator
        ],
        compiler_params=pltpu.CompilerParams(
            dimension_semantics=("parallel", "parallel", "arbitrary"),
            vmem_limit_bytes=48 * 1024 * 1024,
        ),
    )(xb, xb, wq, wk, wv, bq, bk, bv, wo, bo)

    out = out[:, :, :E]                       # strip lane padding
    return jnp.transpose(out, (1, 0, 2))      # back to (L, N, E)


# ---------------------------------------------------------------------------
# Pure-JAX f32 reference (same math) for a sanity check.
# ---------------------------------------------------------------------------
def _reference(x, in_proj_w, in_proj_b, out_proj_w, out_proj_b, num_heads):
    L, N, E = x.shape
    H = num_heads
    Dh = E // H
    qkv = x.reshape(L * N, E) @ in_proj_w.T + in_proj_b
    q, k, v = jnp.split(qkv, 3, axis=-1)

    def to_heads(t):
        return t.reshape(L, N * H, Dh).transpose(1, 0, 2)

    q = to_heads(q) / math.sqrt(Dh)
    k = to_heads(k)
    v = to_heads(v)
    s = jnp.einsum("bld,bmd->blm", q, k)
    p = jax.nn.softmax(s, axis=-1)
    o = jnp.einsum("blm,bmd->bld", p, v)
    o = o.transpose(1, 0, 2).reshape(L * N, E)
    o = o @ out_proj_w.T + out_proj_b
    return o.reshape(L, N, E)


if __name__ == "__main__":
    # small shapes consistent with the module: seq=8, batch=2, embed_dim=32, heads=4
    L, N, E, H = 8, 2, 32, 4

    key = jax.random.PRNGKey(0)
    k1, k2, k3, k4, kx = jax.random.split(key, 5)
    s = 1.0 / math.sqrt(E)
    in_proj_w = jax.random.uniform(k1, (3 * E, E), jnp.float32, -s, s)
    in_proj_b = jax.random.uniform(k2, (3 * E,), jnp.float32, -s, s)
    out_proj_w = jax.random.uniform(k3, (E, E), jnp.float32, -s, s)
    out_proj_b = jax.random.uniform(k4, (E,), jnp.float32, -s, s)
    x = jax.random.normal(kx, (L, N, E), jnp.float32)

    fwd = jax.jit(functools.partial(multihead_attention, num_heads=H))
    out = fwd(x, in_proj_w, in_proj_b, out_proj_w, out_proj_b)
    out = jax.block_until_ready(out)

    ref = _reference(x, in_proj_w, in_proj_b, out_proj_w, out_proj_b, H)
    assert out.shape == (L, N, E)
    # Tolerance relaxed vs the f32 reference because matmul operands run in
    # bf16 on the MXU (accumulation stays f32).
    assert jnp.allclose(out, ref, atol=3e-2, rtol=3e-2), "mismatch vs reference"

    print("KERNEL_OK")
</pallas_src>

<mosaic_0001>
module attributes {stable_mosaic.version = 11 : i64} {
  func.func @_flash_mha_kernel(%arg0: i32, %arg1: i32, %arg2: i32, %arg3: memref<1x8x128xbf16, #tpu.memory_space<vmem>>, %arg4: memref<1x8x128xbf16, #tpu.memory_space<vmem>>, %arg5: memref<128x128xbf16, #tpu.memory_space<vmem>>, %arg6: memref<128x128xbf16, #tpu.memory_space<vmem>>, %arg7: memref<128x128xbf16, #tpu.memory_space<vmem>>, %arg8: memref<1x128xf32, #tpu.memory_space<vmem>>, %arg9: memref<1x128xf32, #tpu.memory_space<vmem>>, %arg10: memref<1x128xf32, #tpu.memory_space<vmem>>, %arg11: memref<128x128xbf16, #tpu.memory_space<vmem>>, %arg12: memref<1x128xf32, #tpu.memory_space<vmem>>, %arg13: memref<1x8x128xf32, #tpu.memory_space<vmem>>, %arg14: memref<8x128xbf16, #tpu.memory_space<vmem>>, %arg15: memref<4x8x1xf32, #tpu.memory_space<vmem>>, %arg16: memref<4x8x1xf32, #tpu.memory_space<vmem>>, %arg17: memref<4x8x8xf32, #tpu.memory_space<vmem>>) attributes {dimension_semantics = [#tpu.dimension_semantics<parallel>, #tpu.dimension_semantics<parallel>, #tpu.dimension_semantics<arbitrary>], iteration_bounds = array<i64: 2, 1, 1>, scalar_prefetch = 0 : i64, scratch_operands = 4 : i64, tpu.core_type = #tpu.core_type<tc>, window_params = [{transform_indices = @transform_0, window_bounds = array<i64: 1, 8, 128>}, {transform_indices = @transform_1, window_bounds = array<i64: 1, 8, 128>}, {pipeline_mode = #tpu.pipeline_mode<synchronous>, transform_indices = @transform_2, window_bounds = array<i64: 128, 128>}, {pipeline_mode = #tpu.pipeline_mode<synchronous>, transform_indices = @transform_3, window_bounds = array<i64: 128, 128>}, {pipeline_mode = #tpu.pipeline_mode<synchronous>, transform_indices = @transform_4, window_bounds = array<i64: 128, 128>}, {pipeline_mode = #tpu.pipeline_mode<synchronous>, transform_indices = @transform_5, window_bounds = array<i64: 1, 128>}, {pipeline_mode = #tpu.pipeline_mode<synchronous>, transform_indices = @transform_6, window_bounds = array<i64: 1, 128>}, {pipeline_mode = #tpu.pipeline_mode<synchronous>, transform_indices = @transform_7, window_bounds = array<i64: 1, 128>}, {pipeline_mode = #tpu.pipeline_mode<synchronous>, transform_indices = @transform_8, window_bounds = array<i64: 128, 128>}, {pipeline_mode = #tpu.pipeline_mode<synchronous>, transform_indices = @transform_9, window_bounds = array<i64: 1, 128>}, {transform_indices = @transform_10, window_bounds = array<i64: 1, 8, 128>}]} {
    %c0_i32 = arith.constant 0 : i32
    %0 = arith.cmpi eq, %arg2, %c0_i32 : i32
    %1 = arith.extui %0 : i1 to i32
    %c0_i32_0 = arith.constant 0 : i32
    %2 = arith.cmpi ne, %1, %c0_i32_0 : i32
    scf.if %2 {
      %c0_104 = arith.constant 0 : index
      %c0_105 = arith.constant 0 : index
      %c0_106 = arith.constant 0 : index
      %164 = vector.load %arg3[%c0_104, %c0_105, %c0_106] : memref<1x8x128xbf16, #tpu.memory_space<vmem>>, vector<1x8x128xbf16>
      %165 = vector.shape_cast %164 : vector<1x8x128xbf16> to vector<8x128xbf16>
      %c0_107 = arith.constant 0 : index
      %c0_108 = arith.constant 0 : index
      %166 = vector.load %arg5[%c0_107, %c0_108] : memref<128x128xbf16, #tpu.memory_space<vmem>>, vector<128x128xbf16>
      %cst_109 = arith.constant dense<0.000000e+00> : vector<8x128xf32>
      %167 = tpu.matmul %165, %166, %cst_109 {dimension_numbers = #tpu.dot_dimension_numbers<[1], [1], [0], [0], [0, 0, 1, 0], [], []>} : vector<8x128xbf16>, vector<128x128xbf16>, vector<8x128xf32> -> vector<8x128xf32>
      %c0_110 = arith.constant 0 : index
      %c0_111 = arith.constant 0 : index
      %168 = vector.load %arg8[%c0_110, %c0_111] : memref<1x128xf32, #tpu.memory_space<vmem>>, vector<1x128xf32>
      %169 = vector.broadcast %168 : vector<1x128xf32> to vector<8x128xf32>
      %170 = arith.addf %167, %169 : vector<8x128xf32>
      %cst_112 = arith.constant 0.353553385 : f32
      %171 = vector.broadcast %cst_112 : f32 to vector<8x128xf32>
      %172 = arith.mulf %170, %171 : vector<8x128xf32>
      %173 = arith.truncf %172 : vector<8x128xf32> to vector<8x128xbf16>
      %c0_113 = arith.constant 0 : index
      %c0_114 = arith.constant 0 : index
      %174 = vector.load %arg14[%c0_113, %c0_114] : memref<8x128xbf16, #tpu.memory_space<vmem>>, vector<8x128xbf16>
      tpu.vector_store %arg14[%c0_113, %c0_114], %173 {strides = array<i32>} : memref<8x128xbf16, #tpu.memory_space<vmem>>, vector<8x128xbf16>,
      %cst_115 = arith.constant 0xFF800000 : f32
      %175 = vector.broadcast %cst_115 : f32 to vector<4x8x1xf32>
      %c0_116 = arith.constant 0 : index
      %c0_117 = arith.constant 0 : index
      %c0_118 = arith.constant 0 : index
      %176 = vector.load %arg15[%c0_116, %c0_117, %c0_118] : memref<4x8x1xf32, #tpu.memory_space<vmem>>, vector<4x8x1xf32>
      tpu.vector_store %arg15[%c0_116, %c0_117, %c0_118], %175 {strides = array<i32>} : memref<4x8x1xf32, #tpu.memory_space<vmem>>, vector<4x8x1xf32>,
      %cst_119 = arith.constant 0.000000e+00 : f32
      %177 = vector.broadcast %cst_119 : f32 to vector<4x8x1xf32>
      %c0_120 = arith.constant 0 : index
      %c0_121 = arith.constant 0 : index
      %c0_122 = arith.constant 0 : index
      %178 = vector.load %arg16[%c0_120, %c0_121, %c0_122] : memref<4x8x1xf32, #tpu.memory_space<vmem>>, vector<4x8x1xf32>
      tpu.vector_store %arg16[%c0_120, %c0_121, %c0_122], %177 {strides = array<i32>} : memref<4x8x1xf32, #tpu.memory_space<vmem>>, vector<4x8x1xf32>,
      %cst_123 = arith.constant 0.000000e+00 : f32
      %179 = vector.broadcast %cst_123 : f32 to vector<4x8x8xf32>
      %c0_124 = arith.constant 0 : index
      %c0_125 = arith.constant 0 : index
      %c0_126 = arith.constant 0 : index
      %180 = vector.load %arg17[%c0_124, %c0_125, %c0_126] : memref<4x8x8xf32, #tpu.memory_space<vmem>>, vector<4x8x8xf32>
      tpu.vector_store %arg17[%c0_124, %c0_125, %c0_126], %179 {strides = array<i32>} : memref<4x8x8xf32, #tpu.memory_space<vmem>>, vector<4x8x8xf32>,
    } else {
    }
    %c0 = arith.constant 0 : index
    %c0_1 = arith.constant 0 : index
    %c0_2 = arith.constant 0 : index
    %3 = vector.load %arg4[%c0, %c0_1, %c0_2] : memref<1x8x128xbf16, #tpu.memory_space<vmem>>, vector<1x8x128xbf16>
    %4 = vector.shape_cast %3 : vector<1x8x128xbf16> to vector<8x128xbf16>
    %c0_3 = arith.constant 0 : index
    %c0_4 = arith.constant 0 : index
    %5 = vector.load %arg6[%c0_3, %c0_4] : memref<128x128xbf16, #tpu.memory_space<vmem>>, vector<128x128xbf16>
    %cst = arith.constant dense<0.000000e+00> : vector<8x128xf32>
    %6 = tpu.matmul %4, %5, %cst {dimension_numbers = #tpu.dot_dimension_numbers<[1], [1], [0], [0], [0, 0, 1, 0], [], []>} : vector<8x128xbf16>, vector<128x128xbf16>, vector<8x128xf32> -> vector<8x128xf32>
    %c0_5 = arith.constant 0 : index
    %c0_6 = arith.constant 0 : index
    %7 = vector.load %arg9[%c0_5, %c0_6] : memref<1x128xf32, #tpu.memory_space<vmem>>, vector<1x128xf32>
    %8 = vector.broadcast %7 : vector<1x128xf32> to vector<8x128xf32>
    %9 = arith.addf %6, %8 : vector<8x128xf32>
    %10 = arith.truncf %9 : vector<8x128xf32> to vector<8x128xbf16>
    %c0_7 = arith.constant 0 : index
    %c0_8 = arith.constant 0 : index
    %11 = vector.load %arg7[%c0_7, %c0_8] : memref<128x128xbf16, #tpu.memory_space<vmem>>, vector<128x128xbf16>
    %cst_9 = arith.constant dense<0.000000e+00> : vector<8x128xf32>
    %12 = tpu.matmul %4, %11, %cst_9 {dimension_numbers = #tpu.dot_dimension_numbers<[1], [1], [0], [0], [0, 0, 1, 0], [], []>} : vector<8x128xbf16>, vector<128x128xbf16>, vector<8x128xf32> -> vector<8x128xf32>
    %c0_10 = arith.constant 0 : index
    %c0_11 = arith.constant 0 : index
    %13 = vector.load %arg10[%c0_10, %c0_11] : memref<1x128xf32, #tpu.memory_space<vmem>>, vector<1x128xf32>
    %14 = vector.broadcast %13 : vector<1x128xf32> to vector<8x128xf32>
    %15 = arith.addf %12, %14 : vector<8x128xf32>
    %16 = arith.truncf %15 : vector<8x128xf32> to vector<8x128xbf16>
    %c0_12 = arith.constant 0 : index
    %c0_13 = arith.constant 0 : index
    %17 = vector.load %arg14[%c0_12, %c0_13] : memref<8x128xbf16, #tpu.memory_space<vmem>>, vector<8x8xbf16>
    %18 = vector.extract_strided_slice %10 {offsets = [0, 0], sizes = [8, 8], strides = [1, 1]} : vector<8x128xbf16> to vector<8x8xbf16>
    %19 = vector.extract_strided_slice %16 {offsets = [0, 0], sizes = [8, 8], strides = [1, 1]} : vector<8x128xbf16> to vector<8x8xbf16>
    %cst_14 = arith.constant dense<0.000000e+00> : vector<8x8xf32>
    %20 = tpu.matmul %17, %18, %cst_14 {dimension_numbers = #tpu.dot_dimension_numbers<[1], [1], [0], [0], [0, 0, 1, 0], [], []>} : vector<8x8xbf16>, vector<8x8xbf16>, vector<8x8xf32> -> vector<8x8xf32>
    %c0_15 = arith.constant 0 : index
    %c0_16 = arith.constant 0 : index
    %c0_17 = arith.constant 0 : index
    %21 = vector.load %arg15[%c0_15, %c0_16, %c0_17] : memref<4x8x1xf32, #tpu.memory_space<vmem>>, vector<1x8x1xf32>
    %22 = vector.shape_cast %21 : vector<1x8x1xf32> to vector<8x1xf32>
    %cst_18 = arith.constant dense<0xFF800000> : vector<8xf32>
    %23 = vector.multi_reduction <maximumf>, %20, %cst_18 [1] : vector<8x8xf32> to vector<8xf32>
    %24 = vector.shape_cast %23 : vector<8xf32> to vector<8x1xf32>
    %25 = arith.maximumf %22, %24 : vector<8x1xf32>
    %26 = arith.subf %22, %25 : vector<8x1xf32>
    %27 = math.exp %26 : vector<8x1xf32>
    %28 = vector.broadcast %25 : vector<8x1xf32> to vector<8x8xf32>
    %29 = arith.subf %20, %28 : vector<8x8xf32>
    %30 = math.exp %29 : vector<8x8xf32>
    %c0_19 = arith.constant 0 : index
    %c0_20 = arith.constant 0 : index
    %c0_21 = arith.constant 0 : index
    %31 = vector.load %arg16[%c0_19, %c0_20, %c0_21] : memref<4x8x1xf32, #tpu.memory_space<vmem>>, vector<1x8x1xf32>
    %32 = vector.shape_cast %31 : vector<1x8x1xf32> to vector<8x1xf32>
    %33 = arith.mulf %27, %32 : vector<8x1xf32>
    %cst_22 = arith.constant dense<0.000000e+00> : vector<8xf32>
    %34 = vector.multi_reduction <add>, %30, %cst_22 [1] : vector<8x8xf32> to vector<8xf32>
    %35 = vector.shape_cast %34 : vector<8xf32> to vector<8x1xf32>
    %36 = arith.addf %33, %35 : vector<8x1xf32>
    %c0_23 = arith.constant 0 : index
    %c0_24 = arith.constant 0 : index
    %c0_25 = arith.constant 0 : index
    %37 = vector.load %arg16[%c0_23, %c0_24, %c0_25] : memref<4x8x1xf32, #tpu.memory_space<vmem>>, vector<1x8x1xf32>
    %38 = vector.shape_cast %37 : vector<1x8x1xf32> to vector<8x1xf32>
    %39 = vector.shape_cast %36 : vector<8x1xf32> to vector<1x8x1xf32>
    tpu.vector_store %arg16[%c0_23, %c0_24, %c0_25], %39 {strides = array<i32>} : memref<4x8x1xf32, #tpu.memory_space<vmem>>, vector<1x8x1xf32>,
    %c0_26 = arith.constant 0 : index
    %c0_27 = arith.constant 0 : index
    %c0_28 = arith.constant 0 : index
    %40 = vector.load %arg17[%c0_26, %c0_27, %c0_28] : memref<4x8x8xf32, #tpu.memory_space<vmem>>, vector<1x8x8xf32>
    %41 = vector.shape_cast %40 : vector<1x8x8xf32> to vector<8x8xf32>
    %42 = vector.broadcast %27 : vector<8x1xf32> to vector<8x8xf32>
    %43 = arith.mulf %42, %41 : vector<8x8xf32>
    %44 = arith.truncf %30 : vector<8x8xf32> to vector<8x8xbf16>
    %cst_29 = arith.constant dense<0.000000e+00> : vector<8x8xf32>
    %45 = tpu.matmul %44, %19, %cst_29 {dimension_numbers = #tpu.dot_dimension_numbers<[1], [0], [0], [1], [0, 0, 1, 1], [], []>} : vector<8x8xbf16>, vector<8x8xbf16>, vector<8x8xf32> -> vector<8x8xf32>
    %46 = arith.addf %43, %45 : vector<8x8xf32>
    %c0_30 = arith.constant 0 : index
    %c0_31 = arith.constant 0 : index
    %c0_32 = arith.constant 0 : index
    %47 = vector.load %arg17[%c0_30, %c0_31, %c0_32] : memref<4x8x8xf32, #tpu.memory_space<vmem>>, vector<1x8x8xf32>
    %48 = vector.shape_cast %47 : vector<1x8x8xf32> to vector<8x8xf32>
    %49 = vector.shape_cast %46 : vector<8x8xf32> to vector<1x8x8xf32>
    tpu.vector_store %arg17[%c0_30, %c0_31, %c0_32], %49 {strides = array<i32>} : memref<4x8x8xf32, #tpu.memory_space<vmem>>, vector<1x8x8xf32>,
    %c0_33 = arith.constant 0 : index
    %c0_34 = arith.constant 0 : index
    %c0_35 = arith.constant 0 : index
    %50 = vector.load %arg15[%c0_33, %c0_34, %c0_35] : memref<4x8x1xf32, #tpu.memory_space<vmem>>, vector<1x8x1xf32>
    %51 = vector.shape_cast %50 : vector<1x8x1xf32> to vector<8x1xf32>
    %52 = vector.shape_cast %25 : vector<8x1xf32> to vector<1x8x1xf32>
    tpu.vector_store %arg15[%c0_33, %c0_34, %c0_35], %52 {strides = array<i32>} : memref<4x8x1xf32, #tpu.memory_space<vmem>>, vector<1x8x1xf32>,
    %c0_36 = arith.constant 0 : index
    %c8 = arith.constant 8 : index
    %53 = vector.load %arg14[%c0_36, %c8] : memref<8x128xbf16, #tpu.memory_space<vmem>>, vector<8x8xbf16>
    %54 = vector.extract_strided_slice %10 {offsets = [0, 8], sizes = [8, 8], strides = [1, 1]} : vector<8x128xbf16> to vector<8x8xbf16>
    %55 = vector.extract_strided_slice %16 {offsets = [0, 8], sizes = [8, 8], strides = [1, 1]} : vector<8x128xbf16> to vector<8x8xbf16>
    %cst_37 = arith.constant dense<0.000000e+00> : vector<8x8xf32>
    %56 = tpu.matmul %53, %54, %cst_37 {dimension_numbers = #tpu.dot_dimension_numbers<[1], [1], [0], [0], [0, 0, 1, 0], [], []>} : vector<8x8xbf16>, vector<8x8xbf16>, vector<8x8xf32> -> vector<8x8xf32>
    %c1 = arith.constant 1 : index
    %c0_38 = arith.constant 0 : index
    %c0_39 = arith.constant 0 : index
    %57 = vector.load %arg15[%c1, %c0_38, %c0_39] : memref<4x8x1xf32, #tpu.memory_space<vmem>>, vector<1x8x1xf32>
    %58 = vector.shape_cast %57 : vector<1x8x1xf32> to vector<8x1xf32>
    %cst_40 = arith.constant dense<0xFF800000> : vector<8xf32>
    %59 = vector.multi_reduction <maximumf>, %56, %cst_40 [1] : vector<8x8xf32> to vector<8xf32>
    %60 = vector.shape_cast %59 : vector<8xf32> to vector<8x1xf32>
    %61 = arith.maximumf %58, %60 : vector<8x1xf32>
    %62 = arith.subf %58, %61 : vector<8x1xf32>
    %63 = math.exp %62 : vector<8x1xf32>
    %64 = vector.broadcast %61 : vector<8x1xf32> to vector<8x8xf32>
    %65 = arith.subf %56, %64 : vector<8x8xf32>
    %66 = math.exp %65 : vector<8x8xf32>
    %c1_41 = arith.constant 1 : index
    %c0_42 = arith.constant 0 : index
    %c0_43 = arith.constant 0 : index
    %67 = vector.load %arg16[%c1_41, %c0_42, %c0_43] : memref<4x8x1xf32, #tpu.memory_space<vmem>>, vector<1x8x1xf32>
    %68 = vector.shape_cast %67 : vector<1x8x1xf32> to vector<8x1xf32>
    %69 = arith.mulf %63, %68 : vector<8x1xf32>
    %cst_44 = arith.constant dense<0.000000e+00> : vector<8xf32>
    %70 = vector.multi_reduction <add>, %66, %cst_44 [1] : vector<8x8xf32> to vector<8xf32>
    %71 = vector.shape_cast %70 : vector<8xf32> to vector<8x1xf32>
    %72 = arith.addf %69, %71 : vector<8x1xf32>
    %c1_45 = arith.constant 1 : index
    %c0_46 = arith.constant 0 : index
    %c0_47 = arith.constant 0 : index
    %73 = vector.load %arg16[%c1_45, %c0_46, %c0_47] : memref<4x8x1xf32, #tpu.memory_space<vmem>>, vector<1x8x1xf32>
    %74 = vector.shape_cast %73 : vector<1x8x1xf32> to vector<8x1xf32>
    %75 = vector.shape_cast %72 : vector<8x1xf32> to vector<1x8x1xf32>
    tpu.vector_store %arg16[%c1_45, %c0_46, %c0_47], %75 {strides = array<i32>} : memref<4x8x1xf32, #tpu.memory_space<vmem>>, vector<1x8x1xf32>,
    %c1_48 = arith.constant 1 : index
    %c0_49 = arith.constant 0 : index
    %c0_50 = arith.constant 0 : index
    %76 = vector.load %arg17[%c1_48, %c0_49, %c0_50] : memref<4x8x8xf32, #tpu.memory_space<vmem>>, vector<1x8x8xf32>
    %77 = vector.shape_cast %76 : vector<1x8x8xf32> to vector<8x8xf32>
    %78 = vector.broadcast %63 : vector<8x1xf32> to vector<8x8xf32>
    %79 = arith.mulf %78, %77 : vector<8x8xf32>
    %80 = arith.truncf %66 : vector<8x8xf32> to vector<8x8xbf16>
    %cst_51 = arith.constant dense<0.000000e+00> : vector<8x8xf32>
    %81 = tpu.matmul %80, %55, %cst_51 {dimension_numbers = #tpu.dot_dimension_numbers<[1], [0], [0], [1], [0, 0, 1, 1], [], []>} : vector<8x8xbf16>, vector<8x8xbf16>, vector<8x8xf32> -> vector<8x8xf32>
    %82 = arith.addf %79, %81 : vector<8x8xf32>
    %c1_52 = arith.constant 1 : index
    %c0_53 = arith.constant 0 : index
    %c0_54 = arith.constant 0 : index
    %83 = vector.load %arg17[%c1_52, %c0_53, %c0_54] : memref<4x8x8xf32, #tpu.memory_space<vmem>>, vector<1x8x8xf32>
    %84 = vector.shape_cast %83 : vector<1x8x8xf32> to vector<8x8xf32>
    %85 = vector.shape_cast %82 : vector<8x8xf32> to vector<1x8x8xf32>
    tpu.vector_store %arg17[%c1_52, %c0_53, %c0_54], %85 {strides = array<i32>} : memref<4x8x8xf32, #tpu.memory_space<vmem>>, vector<1x8x8xf32>,
    %c1_55 = arith.constant 1 : index
    %c0_56 = arith.constant 0 : index
    %c0_57 = arith.constant 0 : index
    %86 = vector.load %arg15[%c1_55, %c0_56, %c0_57] : memref<4x8x1xf32, #tpu.memory_space<vmem>>, vector<1x8x1xf32>
    %87 = vector.shape_cast %86 : vector<1x8x1xf32> to vector<8x1xf32>
    %88 = vector.shape_cast %61 : vector<8x1xf32> to vector<1x8x1xf32>
    tpu.vector_store %arg15[%c1_55, %c0_56, %c0_57], %88 {strides = array<i32>} : memref<4x8x1xf32, #tpu.memory_space<vmem>>, vector<1x8x1xf32>,
    %c0_58 = arith.constant 0 : index
    %c16 = arith.constant 16 : index
    %89 = vector.load %arg14[%c0_58, %c16] : memref<8x128xbf16, #tpu.memory_space<vmem>>, vector<8x8xbf16>
    %90 = vector.extract_strided_slice %10 {offsets = [0, 16], sizes = [8, 8], strides = [1, 1]} : vector<8x128xbf16> to vector<8x8xbf16>
    %91 = vector.extract_strided_slice %16 {offsets = [0, 16], sizes = [8, 8], strides = [1, 1]} : vector<8x128xbf16> to vector<8x8xbf16>
    %cst_59 = arith.constant dense<0.000000e+00> : vector<8x8xf32>
    %92 = tpu.matmul %89, %90, %cst_59 {dimension_numbers = #tpu.dot_dimension_numbers<[1], [1], [0], [0], [0, 0, 1, 0], [], []>} : vector<8x8xbf16>, vector<8x8xbf16>, vector<8x8xf32> -> vector<8x8xf32>
    %c2 = arith.constant 2 : index
    %c0_60 = arith.constant 0 : index
    %c0_61 = arith.constant 0 : index
    %93 = vector.load %arg15[%c2, %c0_60, %c0_61] : memref<4x8x1xf32, #tpu.memory_space<vmem>>, vector<1x8x1xf32>
    %94 = vector.shape_cast %93 : vector<1x8x1xf32> to vector<8x1xf32>
    %cst_62 = arith.constant dense<0xFF800000> : vector<8xf32>
    %95 = vector.multi_reduction <maximumf>, %92, %cst_62 [1] : vector<8x8xf32> to vector<8xf32>
    %96 = vector.shape_cast %95 : vector<8xf32> to vector<8x1xf32>
    %97 = arith.maximumf %94, %96 : vector<8x1xf32>
    %98 = arith.subf %94, %97 : vector<8x1xf32>
    %99 = math.exp %98 : vector<8x1xf32>
    %100 = vector.broadcast %97 : vector<8x1xf32> to vector<8x8xf32>
    %101 = arith.subf %92, %100 : vector<8x8xf32>
    %102 = math.exp %101 : vector<8x8xf32>
    %c2_63 = arith.constant 2 : index
    %c0_64 = arith.constant 0 : index
    %c0_65 = arith.constant 0 : index
    %103 = vector.load %arg16[%c2_63, %c0_64, %c0_65] : memref<4x8x1xf32, #tpu.memory_space<vmem>>, vector<1x8x1xf32>
    %104 = vector.shape_cast %103 : vector<1x8x1xf32> to vector<8x1xf32>
    %105 = arith.mulf %99, %104 : vector<8x1xf32>
    %cst_66 = arith.constant dense<0.000000e+00> : vector<8xf32>
    %106 = vector.multi_reduction <add>, %102, %cst_66 [1] : vector<8x8xf32> to vector<8xf32>
    %107 = vector.shape_cast %106 : vector<8xf32> to vector<8x1xf32>
    %108 = arith.addf %105, %107 : vector<8x1xf32>
    %c2_67 = arith.constant 2 : index
    %c0_68 = arith.constant 0 : index
    %c0_69 = arith.constant 0 : index
    %109 = vector.load %arg16[%c2_67, %c0_68, %c0_69] : memref<4x8x1xf32, #tpu.memory_space<vmem>>, vector<1x8x1xf32>
    %110 = vector.shape_cast %109 : vector<1x8x1xf32> to vector<8x1xf32>
    %111 = vector.shape_cast %108 : vector<8x1xf32> to vector<1x8x1xf32>
    tpu.vector_store %arg16[%c2_67, %c0_68, %c0_69], %111 {strides = array<i32>} : memref<4x8x1xf32, #tpu.memory_space<vmem>>, vector<1x8x1xf32>,
    %c2_70 = arith.constant 2 : index
    %c0_71 = arith.constant 0 : index
    %c0_72 = arith.constant 0 : index
    %112 = vector.load %arg17[%c2_70, %c0_71, %c0_72] : memref<4x8x8xf32, #tpu.memory_space<vmem>>, vector<1x8x8xf32>
    %113 = vector.shape_cast %112 : vector<1x8x8xf32> to vector<8x8xf32>
    %114 = vector.broadcast %99 : vector<8x1xf32> to vector<8x8xf32>
    %115 = arith.mulf %114, %113 : vector<8x8xf32>
    %116 = arith.truncf %102 : vector<8x8xf32> to vector<8x8xbf16>
    %cst_73 = arith.constant dense<0.000000e+00> : vector<8x8xf32>
    %117 = tpu.matmul %116, %91, %cst_73 {dimension_numbers = #tpu.dot_dimension_numbers<[1], [0], [0], [1], [0, 0, 1, 1], [], []>} : vector<8x8xbf16>, vector<8x8xbf16>, vector<8x8xf32> -> vector<8x8xf32>
    %118 = arith.addf %115, %117 : vector<8x8xf32>
    %c2_74 = arith.constant 2 : index
    %c0_75 = arith.constant 0 : index
    %c0_76 = arith.constant 0 : index
    %119 = vector.load %arg17[%c2_74, %c0_75, %c0_76] : memref<4x8x8xf32, #tpu.memory_space<vmem>>, vector<1x8x8xf32>
    %120 = vector.shape_cast %119 : vector<1x8x8xf32> to vector<8x8xf32>
    %121 = vector.shape_cast %118 : vector<8x8xf32> to vector<1x8x8xf32>
    tpu.vector_store %arg17[%c2_74, %c0_75, %c0_76], %121 {strides = array<i32>} : memref<4x8x8xf32, #tpu.memory_space<vmem>>, vector<1x8x8xf32>,
    %c2_77 = arith.constant 2 : index
    %c0_78 = arith.constant 0 : index
    %c0_79 = arith.constant 0 : index
    %122 = vector.load %arg15[%c2_77, %c0_78, %c0_79] : memref<4x8x1xf32, #tpu.memory_space<vmem>>, vector<1x8x1xf32>
    %123 = vector.shape_cast %122 : vector<1x8x1xf32> to vector<8x1xf32>
    %124 = vector.shape_cast %97 : vector<8x1xf32> to vector<1x8x1xf32>
    tpu.vector_store %arg15[%c2_77, %c0_78, %c0_79], %124 {strides = array<i32>} : memref<4x8x1xf32, #tpu.memory_space<vmem>>, vector<1x8x1xf32>,
    %c0_80 = arith.constant 0 : index
    %c24 = arith.constant 24 : index
    %125 = vector.load %arg14[%c0_80, %c24] : memref<8x128xbf16, #tpu.memory_space<vmem>>, vector<8x8xbf16>
    %126 = vector.extract_strided_slice %10 {offsets = [0, 24], sizes = [8, 8], strides = [1, 1]} : vector<8x128xbf16> to vector<8x8xbf16>
    %127 = vector.extract_strided_slice %16 {offsets = [0, 24], sizes = [8, 8], strides = [1, 1]} : vector<8x128xbf16> to vector<8x8xbf16>
    %cst_81 = arith.constant dense<0.000000e+00> : vector<8x8xf32>
    %128 = tpu.matmul %125, %126, %cst_81 {dimension_numbers = #tpu.dot_dimension_numbers<[1], [1], [0], [0], [0, 0, 1, 0], [], []>} : vector<8x8xbf16>, vector<8x8xbf16>, vector<8x8xf32> -> vector<8x8xf32>
    %c3 = arith.constant 3 : index
    %c0_82 = arith.constant 0 : index
    %c0_83 = arith.constant 0 : index
    %129 = vector.load %arg15[%c3, %c0_82, %c0_83] : memref<4x8x1xf32, #tpu.memory_space<vmem>>, vector<1x8x1xf32>
    %130 = vector.shape_cast %129 : vector<1x8x1xf32> to vector<8x1xf32>
    %cst_84 = arith.constant dense<0xFF800000> : vector<8xf32>
    %131 = vector.multi_reduction <maximumf>, %128, %cst_84 [1] : vector<8x8xf32> to vector<8xf32>
    %132 = vector.shape_cast %131 : vector<8xf32> to vector<8x1xf32>
    %133 = arith.maximumf %130, %132 : vector<8x1xf32>
    %134 = arith.subf %130, %133 : vector<8x1xf32>
    %135 = math.exp %134 : vector<8x1xf32>
    %136 = vector.broadcast %133 : vector<8x1xf32> to vector<8x8xf32>
    %137 = arith.subf %128, %136 : vector<8x8xf32>
    %138 = math.exp %137 : vector<8x8xf32>
    %c3_85 = arith.constant 3 : index
    %c0_86 = arith.constant 0 : index
    %c0_87 = arith.constant 0 : index
    %139 = vector.load %arg16[%c3_85, %c0_86, %c0_87] : memref<4x8x1xf32, #tpu.memory_space<vmem>>, vector<1x8x1xf32>
    %140 = vector.shape_cast %139 : vector<1x8x1xf32> to vector<8x1xf32>
    %141 = arith.mulf %135, %140 : vector<8x1xf32>
    %cst_88 = arith.constant dense<0.000000e+00> : vector<8xf32>
    %142 = vector.multi_reduction <add>, %138, %cst_88 [1] : vector<8x8xf32> to vector<8xf32>
    %143 = vector.shape_cast %142 : vector<8xf32> to vector<8x1xf32>
    %144 = arith.addf %141, %143 : vector<8x1xf32>
    %c3_89 = arith.constant 3 : index
    %c0_90 = arith.constant 0 : index
    %c0_91 = arith.constant 0 : index
    %145 = vector.load %arg16[%c3_89, %c0_90, %c0_91] : memref<4x8x1xf32, #tpu.memory_space<vmem>>, vector<1x8x1xf32>
    %146 = vector.shape_cast %145 : vector<1x8x1xf32> to vector<8x1xf32>
    %147 = vector.shape_cast %144 : vector<8x1xf32> to vector<1x8x1xf32>
    tpu.vector_store %arg16[%c3_89, %c0_90, %c0_91], %147 {strides = array<i32>} : memref<4x8x1xf32, #tpu.memory_space<vmem>>, vector<1x8x1xf32>,
    %c3_92 = arith.constant 3 : index
    %c0_93 = arith.constant 0 : index
    %c0_94 = arith.constant 0 : index
    %148 = vector.load %arg17[%c3_92, %c0_93, %c0_94] : memref<4x8x8xf32, #tpu.memory_space<vmem>>, vector<1x8x8xf32>
    %149 = vector.shape_cast %148 : vector<1x8x8xf32> to vector<8x8xf32>
    %150 = vector.broadcast %135 : vector<8x1xf32> to vector<8x8xf32>
    %151 = arith.mulf %150, %149 : vector<8x8xf32>
    %152 = arith.truncf %138 : vector<8x8xf32> to vector<8x8xbf16>
    %cst_95 = arith.constant dense<0.000000e+00> : vector<8x8xf32>
    %153 = tpu.matmul %152, %127, %cst_95 {dimension_numbers = #tpu.dot_dimension_numbers<[1], [0], [0], [1], [0, 0, 1, 1], [], []>} : vector<8x8xbf16>, vector<8x8xbf16>, vector<8x8xf32> -> vector<8x8xf32>
    %154 = arith.addf %151, %153 : vector<8x8xf32>
    %c3_96 = arith.constant 3 : index
    %c0_97 = arith.constant 0 : index
    %c0_98 = arith.constant 0 : index
    %155 = vector.load %arg17[%c3_96, %c0_97, %c0_98] : memref<4x8x8xf32, #tpu.memory_space<vmem>>, vector<1x8x8xf32>
    %156 = vector.shape_cast %155 : vector<1x8x8xf32> to vector<8x8xf32>
    %157 = vector.shape_cast %154 : vector<8x8xf32> to vector<1x8x8xf32>
    tpu.vector_store %arg17[%c3_96, %c0_97, %c0_98], %157 {strides = array<i32>} : memref<4x8x8xf32, #tpu.memory_space<vmem>>, vector<1x8x8xf32>,
    %c3_99 = arith.constant 3 : index
    %c0_100 = arith.constant 0 : index
    %c0_101 = arith.constant 0 : index
    %158 = vector.load %arg15[%c3_99, %c0_100, %c0_101] : memref<4x8x1xf32, #tpu.memory_space<vmem>>, vector<1x8x1xf32>
    %159 = vector.shape_cast %158 : vector<1x8x1xf32> to vector<8x1xf32>
    %160 = vector.shape_cast %133 : vector<8x1xf32> to vector<1x8x1xf32>
    tpu.vector_store %arg15[%c3_99, %c0_100, %c0_101], %160 {strides = array<i32>} : memref<4x8x1xf32, #tpu.memory_space<vmem>>, vector<1x8x1xf32>,
    %c0_i32_102 = arith.constant 0 : i32
    %161 = arith.cmpi eq, %arg2, %c0_i32_102 : i32
    %162 = arith.extui %161 : i1 to i32
    %c0_i32_103 = arith.constant 0 : i32
    %163 = arith.cmpi ne, %162, %c0_i32_103 : i32
    scf.if %163 {
      %cst_104 = arith.constant 0.000000e+00 : f32
      %164 = vector.broadcast %cst_104 : f32 to vector<8x128xf32>
      %c0_105 = arith.constant 0 : index
      %c0_106 = arith.constant 0 : index
      %c0_107 = arith.constant 0 : index
      %165 = vector.load %arg17[%c0_105, %c0_106, %c0_107] : memref<4x8x8xf32, #tpu.memory_space<vmem>>, vector<1x8x8xf32>
      %166 = vector.shape_cast %165 : vector<1x8x8xf32> to vector<8x8xf32>
      %c0_108 = arith.constant 0 : index
      %c0_109 = arith.constant 0 : index
      %c0_110 = arith.constant 0 : index
      %167 = vector.load %arg16[%c0_108, %c0_109, %c0_110] : memref<4x8x1xf32, #tpu.memory_space<vmem>>, vector<1x8x1xf32>
      %168 = vector.shape_cast %167 : vector<1x8x1xf32> to vector<8x1xf32>
      %169 = vector.broadcast %168 : vector<8x1xf32> to vector<8x8xf32>
      %170 = arith.divf %166, %169 : vector<8x8xf32>
      %171 = arith.truncf %170 : vector<8x8xf32> to vector<8x8xbf16>
      %c0_111 = arith.constant 0 : index
      %c0_112 = arith.constant 0 : index
      %172 = vector.load %arg11[%c0_111, %c0_112] : memref<128x128xbf16, #tpu.memory_space<vmem>>, vector<128x8xbf16>
      %cst_113 = arith.constant dense<0.000000e+00> : vector<8x128xf32>
      %173 = tpu.matmul %171, %172, %cst_113 {dimension_numbers = #tpu.dot_dimension_numbers<[1], [1], [0], [0], [0, 0, 1, 0], [], []>} : vector<8x8xbf16>, vector<128x8xbf16>, vector<8x128xf32> -> vector<8x128xf32>
      %174 = arith.addf %164, %173 : vector<8x128xf32>
      %c1_114 = arith.constant 1 : index
      %c0_115 = arith.constant 0 : index
      %c0_116 = arith.constant 0 : index
      %175 = vector.load %arg17[%c1_114, %c0_115, %c0_116] : memref<4x8x8xf32, #tpu.memory_space<vmem>>, vector<1x8x8xf32>
      %176 = vector.shape_cast %175 : vector<1x8x8xf32> to vector<8x8xf32>
      %c1_117 = arith.constant 1 : index
      %c0_118 = arith.constant 0 : index
      %c0_119 = arith.constant 0 : index
      %177 = vector.load %arg16[%c1_117, %c0_118, %c0_119] : memref<4x8x1xf32, #tpu.memory_space<vmem>>, vector<1x8x1xf32>
      %178 = vector.shape_cast %177 : vector<1x8x1xf32> to vector<8x1xf32>
      %179 = vector.broadcast %178 : vector<8x1xf32> to vector<8x8xf32>
      %180 = arith.divf %176, %179 : vector<8x8xf32>
      %181 = arith.truncf %180 : vector<8x8xf32> to vector<8x8xbf16>
      %c0_120 = arith.constant 0 : index
      %c8_121 = arith.constant 8 : index
      %182 = vector.load %arg11[%c0_120, %c8_121] : memref<128x128xbf16, #tpu.memory_space<vmem>>, vector<128x8xbf16>
      %cst_122 = arith.constant dense<0.000000e+00> : vector<8x128xf32>
      %183 = tpu.matmul %181, %182, %cst_122 {dimension_numbers = #tpu.dot_dimension_numbers<[1], [1], [0], [0], [0, 0, 1, 0], [], []>} : vector<8x8xbf16>, vector<128x8xbf16>, vector<8x128xf32> -> vector<8x128xf32>
      %184 = arith.addf %174, %183 : vector<8x128xf32>
      %c2_123 = arith.constant 2 : index
      %c0_124 = arith.constant 0 : index
      %c0_125 = arith.constant 0 : index
      %185 = vector.load %arg17[%c2_123, %c0_124, %c0_125] : memref<4x8x8xf32, #tpu.memory_space<vmem>>, vector<1x8x8xf32>
      %186 = vector.shape_cast %185 : vector<1x8x8xf32> to vector<8x8xf32>
      %c2_126 = arith.constant 2 : index
      %c0_127 = arith.constant 0 : index
      %c0_128 = arith.constant 0 : index
      %187 = vector.load %arg16[%c2_126, %c0_127, %c0_128] : memref<4x8x1xf32, #tpu.memory_space<vmem>>, vector<1x8x1xf32>
      %188 = vector.shape_cast %187 : vector<1x8x1xf32> to vector<8x1xf32>
      %189 = vector.broadcast %188 : vector<8x1xf32> to vector<8x8xf32>
      %190 = arith.divf %186, %189 : vector<8x8xf32>
      %191 = arith.truncf %190 : vector<8x8xf32> to vector<8x8xbf16>
      %c0_129 = arith.constant 0 : index
      %c16_130 = arith.constant 16 : index
      %192 = vector.load %arg11[%c0_129, %c16_130] : memref<128x128xbf16, #tpu.memory_space<vmem>>, vector<128x8xbf16>
      %cst_131 = arith.constant dense<0.000000e+00> : vector<8x128xf32>
      %193 = tpu.matmul %191, %192, %cst_131 {dimension_numbers = #tpu.dot_dimension_numbers<[1], [1], [0], [0], [0, 0, 1, 0], [], []>} : vector<8x8xbf16>, vector<128x8xbf16>, vector<8x128xf32> -> vector<8x128xf32>
      %194 = arith.addf %184, %193 : vector<8x128xf32>
      %c3_132 = arith.constant 3 : index
      %c0_133 = arith.constant 0 : index
      %c0_134 = arith.constant 0 : index
      %195 = vector.load %arg17[%c3_132, %c0_133, %c0_134] : memref<4x8x8xf32, #tpu.memory_space<vmem>>, vector<1x8x8xf32>
      %196 = vector.shape_cast %195 : vector<1x8x8xf32> to vector<8x8xf32>
      %c3_135 = arith.constant 3 : index
      %c0_136 = arith.constant 0 : index
      %c0_137 = arith.constant 0 : index
      %197 = vector.load %arg16[%c3_135, %c0_136, %c0_137] : memref<4x8x1xf32, #tpu.memory_space<vmem>>, vector<1x8x1xf32>
      %198 = vector.shape_cast %197 : vector<1x8x1xf32> to vector<8x1xf32>
      %199 = vector.broadcast %198 : vector<8x1xf32> to vector<8x8xf32>
      %200 = arith.divf %196, %199 : vector<8x8xf32>
      %201 = arith.truncf %200 : vector<8x8xf32> to vector<8x8xbf16>
      %c0_138 = arith.constant 0 : index
      %c24_139 = arith.constant 24 : index
      %202 = vector.load %arg11[%c0_138, %c24_139] : memref<128x128xbf16, #tpu.memory_space<vmem>>, vector<128x8xbf16>
      %cst_140 = arith.constant dense<0.000000e+00> : vector<8x128xf32>
      %203 = tpu.matmul %201, %202, %cst_140 {dimension_numbers = #tpu.dot_dimension_numbers<[1], [1], [0], [0], [0, 0, 1, 0], [], []>} : vector<8x8xbf16>, vector<128x8xbf16>, vector<8x128xf32> -> vector<8x128xf32>
      %204 = arith.addf %194, %203 : vector<8x128xf32>
      %c0_141 = arith.constant 0 : index
      %c0_142 = arith.constant 0 : index
      %205 = vector.load %arg12[%c0_141, %c0_142] : memref<1x128xf32, #tpu.memory_space<vmem>>, vector<1x128xf32>
      %206 = vector.broadcast %205 : vector<1x128xf32> to vector<8x128xf32>
      %207 = arith.addf %204, %206 : vector<8x128xf32>
      %c0_143 = arith.constant 0 : index
      %c0_144 = arith.constant 0 : index
      %c0_145 = arith.constant 0 : index
      %208 = vector.load %arg13[%c0_143, %c0_144, %c0_145] : memref<1x8x128xf32, #tpu.memory_space<vmem>>, vector<1x8x128xf32>
      %209 = vector.shape_cast %208 : vector<1x8x128xf32> to vector<8x128xf32>
      %210 = vector.shape_cast %207 : vector<8x128xf32> to vector<1x8x128xf32>
      tpu.vector_store %arg13[%c0_143, %c0_144, %c0_145], %210 {strides = array<i32>} : memref<1x8x128xf32, #tpu.memory_space<vmem>>, vector<1x8x128xf32>,
    } else {
    }
    return
  }
  func.func @transform_0(%arg0: i32, %arg1: i32, %arg2: i32) -> (i32, i32, i32) {
    %c0_i32 = arith.constant 0 : i32
    %c0_i32_0 = arith.constant 0 : i32
    return %arg0, %arg1, %c0_i32 : i32, i32, i32
  }
  func.func @transform_1(%arg0: i32, %arg1: i32, %arg2: i32) -> (i32, i32, i32) {
    %c0_i32 = arith.constant 0 : i32
    %c0_i32_0 = arith.constant 0 : i32
    return %arg0, %arg2, %c0_i32 : i32, i32, i32
  }
  func.func @transform_2(%arg0: i32, %arg1: i32, %arg2: i32) -> (i32, i32) {
    %c0_i32 = arith.constant 0 : i32
    %c0_i32_0 = arith.constant 0 : i32
    %c0_i32_1 = arith.constant 0 : i32
    return %c0_i32, %c0_i32_0 : i32, i32
  }
  func.func @transform_3(%arg0: i32, %arg1: i32, %arg2: i32) -> (i32, i32) {
    %c0_i32 = arith.constant 0 : i32
    %c0_i32_0 = arith.constant 0 : i32
    %c0_i32_1 = arith.constant 0 : i32
    return %c0_i32, %c0_i32_0 : i32, i32
  }
  func.func @transform_4(%arg0: i32, %arg1: i32, %arg2: i32) -> (i32, i32) {
    %c0_i32 = arith.constant 0 : i32
    %c0_i32_0 = arith.constant 0 : i32
    %c0_i32_1 = arith.constant 0 : i32
    return %c0_i32, %c0_i32_0 : i32, i32
  }
  func.func @transform_5(%arg0: i32, %arg1: i32, %arg2: i32) -> (i32, i32) {
    %c0_i32 = arith.constant 0 : i32
    %c0_i32_0 = arith.constant 0 : i32
    %c0_i32_1 = arith.constant 0 : i32
    return %c0_i32, %c0_i32_0 : i32, i32
  }
  func.func @transform_6(%arg0: i32, %arg1: i32, %arg2: i32) -> (i32, i32) {
    %c0_i32 = arith.constant 0 : i32
    %c0_i32_0 = arith.constant 0 : i32
    %c0_i32_1 = arith.constant 0 : i32
    return %c0_i32, %c0_i32_0 : i32, i32
  }
  func.func @transform_7(%arg0: i32, %arg1: i32, %arg2: i32) -> (i32, i32) {
    %c0_i32 = arith.constant 0 : i32
    %c0_i32_0 = arith.constant 0 : i32
    %c0_i32_1 = arith.constant 0 : i32
    return %c0_i32, %c0_i32_0 : i32, i32
  }
  func.func @transform_8(%arg0: i32, %arg1: i32, %arg2: i32) -> (i32, i32) {
    %c0_i32 = arith.constant 0 : i32
    %c0_i32_0 = arith.constant 0 : i32
    %c0_i32_1 = arith.constant 0 : i32
    return %c0_i32, %c0_i32_0 : i32, i32
  }
  func.func @transform_9(%arg0: i32, %arg1: i32, %arg2: i32) -> (i32, i32) {
    %c0_i32 = arith.constant 0 : i32
    %c0_i32_0 = arith.constant 0 : i32
    %c0_i32_1 = arith.constant 0 : i32
    return %c0_i32, %c0_i32_0 : i32, i32
  }
  func.func @transform_10(%arg0: i32, %arg1: i32, %arg2: i32) -> (i32, i32, i32) {
    %c0_i32 = arith.constant 0 : i32
    %c0_i32_0 = arith.constant 0 : i32
    return %arg0, %arg1, %c0_i32 : i32, i32, i32
  }
}

</mosaic_0001>

<llo_original>
// kernel: multihead_attention.1
$region0: #{multihead_attention.1}
  #allocation0 [shape = 'u32[]', space=smem, size = 0x4, offset = 0x4, fixed_abs, tag = 'smem constant byte address 0x4 - core index']
  #allocation1 [shape = 'u32[144,128]{1,0:T(1,128)}', space=vmem, size = 0x12000, scoped, tag = 'internal scratch']
  #allocation2 [shape = 'bf16[8,128]{1,0:T(8,128)(2,1)}', space=vmem, size = 0x800, scoped, tag = 'scratch operand']
  #allocation3 [shape = 'f32[4,8,1]{2,1,0:T(8,128)}', space=vmem, size = 0x4000, scoped, tag = 'scratch operand']
  #allocation4 [shape = 'f32[4,8,1]{2,1,0:T(8,128)}', space=vmem, size = 0x4000, scoped, tag = 'scratch operand']
  #allocation5 [shape = 'f32[4,8,8]{2,1,0:T(8,128)}', space=vmem, size = 0x4000, scoped, tag = 'scratch operand']
  %s0 = inlined_call_operand.vmem [shape: bf16[2,8,128], index: 0, kind: input, shape index: {}, may-alias: {0,1}]
  %s1 = inlined_call_operand.vmem [shape: bf16[2,8,128], index: 1, kind: input, shape index: {}, may-alias: {0,1}]
  %s2 = inlined_call_operand.vmem [shape: bf16[128,128], index: 2, kind: input, shape index: {}]
  %s3 = inlined_call_operand.vmem [shape: bf16[128,128], index: 3, kind: input, shape index: {}]
  %s4 = inlined_call_operand.vmem [shape: bf16[128,128], index: 4, kind: input, shape index: {}]
  %s5 = inlined_call_operand.vmem [shape: f32[1,128], index: 5, kind: input, shape index: {}]
  %s6 = inlined_call_operand.vmem [shape: f32[1,128], index: 6, kind: input, shape index: {}]
  %s7 = inlined_call_operand.vmem [shape: f32[1,128], index: 7, kind: input, shape index: {}]
  %s8 = inlined_call_operand.vmem [shape: bf16[128,128], index: 8, kind: input, shape index: {}]
  %s9 = inlined_call_operand.vmem [shape: f32[1,128], index: 9, kind: input, shape index: {}]
  %s10 = inlined_call_operand.vmem [shape: f32[2,8,128], index: 10, kind: output, shape index: {}]
  %s11 = sld [smem:[#allocation0]]
  $region81: #{multihead_attention.1} parent=0
    _
  %s13 = ssub.s32 1, %s11
  %s14 = scalar_select 0, %s13, %s11
  loop: start=0, step=1, limit=4
  $region2: #{multihead_attention.1} parent=0 // loop_pre_header
    _
  $region3: #{multihead_attention.1} parent=0 // loop_header
    %s16 = sphi 0, %s20
    %p17 = scmp.ge.s32.totalorder %s16, 4
    %s23 = sphi 0, %s42
    %s24 = sphi 0, %s38
    %s25 = sphi 0, %s34
    %s26 = sphi 0, %s23
    %s27 = sphi 0, %s24
    %s28 = sphi 0, %s25
    %s29 = sphi 0, %s26
    %s30 = sphi 0, %s27
    %s31 = sphi 0, %s28
    %s47 = sphi 0, %s49
    %s50 = sphi 0, %s47
    %s51 = sphi 0, %s50
    %s67 = sphi 0, %s51
    %s75 = sphi 0, %s77
    %s78 = sphi 0, %s75
    %s79 = sphi 0, %s78
    %s95 = sphi 0, %s79
    %s99 = sphi 0, %s99
    %s101 = sphi 0, %s99
    %s102 = sphi 0, %s101
    %s116 = sphi 0, %s102
    %s120 = sphi 0, %s120
    %s122 = sphi 0, %s120
    %s123 = sphi 0, %s122
    %s137 = sphi 0, %s123
    %s141 = sphi 0, %s141
    %s143 = sphi 0, %s141
    %s144 = sphi 0, %s143
    %s158 = sphi 0, %s144
    %s162 = sphi 0, %s162
    %s164 = sphi 0, %s162
    %s165 = sphi 0, %s164
    %s179 = sphi 0, %s165
    %s183 = sphi 0, %s183
    %s185 = sphi 0, %s183
    %s186 = sphi 0, %s185
    %s200 = sphi 0, %s186
    %s204 = sphi 0, %s204
    %s206 = sphi 0, %s204
    %s207 = sphi 0, %s206
    %s221 = sphi 0, %s207
    %s225 = sphi 0, %s225
    %s227 = sphi 0, %s225
    %s228 = sphi 0, %s227
    %s242 = sphi 0, %s228
    %s246 = sphi 0, %s246
    %s248 = sphi 0, %s246
    %s249 = sphi 0, %s248
    %s263 = sphi 0, %s249
    %s271 = sphi 0, %s273
    %s274 = sphi 0, %s271
    %s275 = sphi 0, %s274
    %s291 = sphi 0, %s275
  $region4: #{multihead_attention.1} parent=0 // loop_header_branch
    %19 = sbr.rel (%p17) target = $region8
  $region5: #{multihead_attention.1} parent=0 // loop_body
    %s21 = ssub.s32 %s16, 1
    %s22 = ssub.s32 %s16, 2
    %s32 = sadd.s32 1, %s25
    %p33 = scmp.ge.s32.totalorder %s32, 1
    %s34 = scalar_select %p33, 0, %s32
    %s35 = sadd.s32 1, %s24
    %s36 = scalar_select %p33, %s35, %s24
    %p37 = scmp.ge.s32.totalorder %s36, 1
    %s38 = scalar_select %p37, 0, %s36
    %s39 = sadd.s32 1, %s23
    %s40 = scalar_select %p37, %s39, %s23
    %p41 = scmp.ge.s32.totalorder %s40, 2
    %s42 = scalar_select %p41, 0, %s40
    %s43 = ssub.s32 %s23, %s42
    %s44 = ssub.s32 %s24, %s38
    %s45 = sor.u32 %s43, %s44
    %p46 = scmp.eq.s32.totalorder %s45, 0
    %s48 = sadd.s32 %s47, 1
    %s49 = scalar_select %p46, %s47, %s48
    %p52 = pneg %p46
    %p53 = scmp.eq.s32.totalorder %s16, 1
    %p54 = por %p52, %p53
    %p55 = scmp.ne.s32.totalorder %s47, %s50
    %p56 = scmp.eq.s32.totalorder %s16, 0
    %p57 = por %p55, %p56
    %p58 = scmp.ne.s32.totalorder %s47, %s50
    %p59 = scmp.eq.s32.totalorder %s21, 1
    %p60 = por %p58, %p59
    %p61 = scmp.ne.s32.totalorder %s50, %s51
    %p62 = scmp.eq.s32.totalorder %s21, 0
    %p63 = por %p61, %p62
    %p64 = scmp.ne.s32.totalorder %s50, %s51
    %p65 = scmp.eq.s32.totalorder %s22, 1
    %p66 = por %p64, %p65
    %p68 = scmp.ne.s32.totalorder %s51, %s67
    %p69 = scmp.eq.s32.totalorder %s22, 0
    %p70 = por %p68, %p69
    %s71 = ssub.s32 %s23, %s42
    %s72 = ssub.s32 %s25, %s34
    %s73 = sor.u32 %s71, %s72
    %p74 = scmp.eq.s32.totalorder %s73, 0
    %s76 = sadd.s32 %s75, 1
    %s77 = scalar_select %p74, %s75, %s76
    %p80 = pneg %p74
    %p81 = scmp.eq.s32.totalorder %s16, 1
    %p82 = por %p80, %p81
    %p83 = scmp.ne.s32.totalorder %s75, %s78
    %p84 = scmp.eq.s32.totalorder %s16, 0
    %p85 = por %p83, %p84
    %p86 = scmp.ne.s32.totalorder %s75, %s78
    %p87 = scmp.eq.s32.totalorder %s21, 1
    %p88 = por %p86, %p87
    %p89 = scmp.ne.s32.totalorder %s78, %s79
    %p90 = scmp.eq.s32.totalorder %s21, 0
    %p91 = por %p89, %p90
    %p92 = scmp.ne.s32.totalorder %s78, %s79
    %p93 = scmp.eq.s32.totalorder %s22, 1
    %p94 = por %p92, %p93
    %p96 = scmp.ne.s32.totalorder %s79, %s95
    %p97 = scmp.eq.s32.totalorder %s22, 0
    %p98 = por %p96, %p97
    %s100 = sadd.s32 %s99, 1
    %p103 = scmp.eq.s32.totalorder %s16, 1
    %p104 = scmp.ne.s32.totalorder %s99, %s101
    %p105 = scmp.eq.s32.totalorder %s16, 0
    %p106 = por %p104, %p105
    %p107 = scmp.ne.s32.totalorder %s99, %s101
    %p108 = scmp.eq.s32.totalorder %s21, 1
    %p109 = por %p107, %p108
    %p110 = scmp.ne.s32.totalorder %s101, %s102
    %p111 = scmp.eq.s32.totalorder %s21, 0
    %p112 = por %p110, %p111
    %p113 = scmp.ne.s32.totalorder %s101, %s102
    %p114 = scmp.eq.s32.totalorder %s22, 1
    %p115 = por %p113, %p114
    %p117 = scmp.ne.s32.totalorder %s102, %s116
    %p118 = scmp.eq.s32.totalorder %s22, 0
    %p119 = por %p117, %p118
    %s121 = sadd.s32 %s120, 1
    %p124 = scmp.eq.s32.totalorder %s16, 1
    %p125 = scmp.ne.s32.totalorder %s120, %s122
    %p126 = scmp.eq.s32.totalorder %s16, 0
    %p127 = por %p125, %p126
    %p128 = scmp.ne.s32.totalorder %s120, %s122
    %p129 = scmp.eq.s32.totalorder %s21, 1
    %p130 = por %p128, %p129
    %p131 = scmp.ne.s32.totalorder %s122, %s123
    %p132 = scmp.eq.s32.totalorder %s21, 0
    %p133 = por %p131, %p132
    %p134 = scmp.ne.s32.totalorder %s122, %s123
    %p135 = scmp.eq.s32.totalorder %s22, 1
    %p136 = por %p134, %p135
    %p138 = scmp.ne.s32.totalorder %s123, %s137
    %p139 = scmp.eq.s32.totalorder %s22, 0
    %p140 = por %p138, %p139
    %s142 = sadd.s32 %s141, 1
    %p145 = scmp.eq.s32.totalorder %s16, 1
    %p146 = scmp.ne.s32.totalorder %s141, %s143
    %p147 = scmp.eq.s32.totalorder %s16, 0
    %p148 = por %p146, %p147
    %p149 = scmp.ne.s32.totalorder %s141, %s143
    %p150 = scmp.eq.s32.totalorder %s21, 1
    %p151 = por %p149, %p150
    %p152 = scmp.ne.s32.totalorder %s143, %s144
    %p153 = scmp.eq.s32.totalorder %s21, 0
    %p154 = por %p152, %p153
    %p155 = scmp.ne.s32.totalorder %s143, %s144
    %p156 = scmp.eq.s32.totalorder %s22, 1
    %p157 = por %p155, %p156
    %p159 = scmp.ne.s32.totalorder %s144, %s158
    %p160 = scmp.eq.s32.totalorder %s22, 0
    %p161 = por %p159, %p160
    %s163 = sadd.s32 %s162, 1
    %p166 = scmp.eq.s32.totalorder %s16, 1
    %p167 = scmp.ne.s32.totalorder %s162, %s164
    %p168 = scmp.eq.s32.totalorder %s16, 0
    %p169 = por %p167, %p168
    %p170 = scmp.ne.s32.totalorder %s162, %s164
    %p171 = scmp.eq.s32.totalorder %s21, 1
    %p172 = por %p170, %p171
    %p173 = scmp.ne.s32.totalorder %s164, %s165
    %p174 = scmp.eq.s32.totalorder %s21, 0
    %p175 = por %p173, %p174
    %p176 = scmp.ne.s32.totalorder %s164, %s165
    %p177 = scmp.eq.s32.totalorder %s22, 1
    %p178 = por %p176, %p177
    %p180 = scmp.ne.s32.totalorder %s165, %s179
    %p181 = scmp.eq.s32.totalorder %s22, 0
    %p182 = por %p180, %p181
    %s184 = sadd.s32 %s183, 1
    %p187 = scmp.eq.s32.totalorder %s16, 1
    %p188 = scmp.ne.s32.totalorder %s183, %s185
    %p189 = scmp.eq.s32.totalorder %s16, 0
    %p190 = por %p188, %p189
    %p191 = scmp.ne.s32.totalorder %s183, %s185
    %p192 = scmp.eq.s32.totalorder %s21, 1
    %p193 = por %p191, %p192
    %p194 = scmp.ne.s32.totalorder %s185, %s186
    %p195 = scmp.eq.s32.totalorder %s21, 0
    %p196 = por %p194, %p195
    %p197 = scmp.ne.s32.totalorder %s185, %s186
    %p198 = scmp.eq.s32.totalorder %s22, 1
    %p199 = por %p197, %p198
    %p201 = scmp.ne.s32.totalorder %s186, %s200
    %p202 = scmp.eq.s32.totalorder %s22, 0
    %p203 = por %p201, %p202
    %s205 = sadd.s32 %s204, 1
    %p208 = scmp.eq.s32.totalorder %s16, 1
    %p209 = scmp.ne.s32.totalorder %s204, %s206
    %p210 = scmp.eq.s32.totalorder %s16, 0
    %p211 = por %p209, %p210
    %p212 = scmp.ne.s32.totalorder %s204, %s206
    %p213 = scmp.eq.s32.totalorder %s21, 1
    %p214 = por %p212, %p213
    %p215 = scmp.ne.s32.totalorder %s206, %s207
    %p216 = scmp.eq.s32.totalorder %s21, 0
    %p217 = por %p215, %p216
    %p218 = scmp.ne.s32.totalorder %s206, %s207
    %p219 = scmp.eq.s32.totalorder %s22, 1
    %p220 = por %p218, %p219
    %p222 = scmp.ne.s32.totalorder %s207, %s221
    %p223 = scmp.eq.s32.totalorder %s22, 0
    %p224 = por %p222, %p223
    %s226 = sadd.s32 %s225, 1
    %p229 = scmp.eq.s32.totalorder %s16, 1
    %p230 = scmp.ne.s32.totalorder %s225, %s227
    %p231 = scmp.eq.s32.totalorder %s16, 0
    %p232 = por %p230, %p231
    %p233 = scmp.ne.s32.totalorder %s225, %s227
    %p234 = scmp.eq.s32.totalorder %s21, 1
    %p235 = por %p233, %p234
    %p236 = scmp.ne.s32.totalorder %s227, %s228
    %p237 = scmp.eq.s32.totalorder %s21, 0
    %p238 = por %p236, %p237
    %p239 = scmp.ne.s32.totalorder %s227, %s228
    %p240 = scmp.eq.s32.totalorder %s22, 1
    %p241 = por %p239, %p240
    %p243 = scmp.ne.s32.totalorder %s228, %s242
    %p244 = scmp.eq.s32.totalorder %s22, 0
    %p245 = por %p243, %p244
    %s247 = sadd.s32 %s246, 1
    %p250 = scmp.eq.s32.totalorder %s16, 1
    %p251 = scmp.ne.s32.totalorder %s246, %s248
    %p252 = scmp.eq.s32.totalorder %s16, 0
    %p253 = por %p251, %p252
    %p254 = scmp.ne.s32.totalorder %s246, %s248
    %p255 = scmp.eq.s32.totalorder %s21, 1
    %p256 = por %p254, %p255
    %p257 = scmp.ne.s32.totalorder %s248, %s249
    %p258 = scmp.eq.s32.totalorder %s21, 0
    %p259 = por %p257, %p258
    %p260 = scmp.ne.s32.totalorder %s248, %s249
    %p261 = scmp.eq.s32.totalorder %s22, 1
    %p262 = por %p260, %p261
    %p264 = scmp.ne.s32.totalorder %s249, %s263
    %p265 = scmp.eq.s32.totalorder %s22, 0
    %p266 = por %p264, %p265
    %s267 = ssub.s32 %s23, %s42
    %s268 = ssub.s32 %s24, %s38
    %s269 = sor.u32 %s267, %s268
    %p270 = scmp.eq.s32.totalorder %s269, 0
    %s272 = sadd.s32 %s271, 1
    %s273 = scalar_select %p270, %s271, %s272
    %p276 = pneg %p270
    %p277 = scmp.eq.s32.totalorder %s16, 1
    %p278 = por %p276, %p277
    %p279 = scmp.ne.s32.totalorder %s271, %s274
    %p280 = scmp.eq.s32.totalorder %s16, 0
    %p281 = por %p279, %p280
    %p282 = scmp.ne.s32.totalorder %s271, %s274
    %p283 = scmp.eq.s32.totalorder %s21, 1
    %p284 = por %p282, %p283
    %p285 = scmp.ne.s32.totalorder %s274, %s275
    %p286 = scmp.eq.s32.totalorder %s21, 0
    %p287 = por %p285, %p286
    %p288 = scmp.ne.s32.totalorder %s274, %s275
    %p289 = scmp.eq.s32.totalorder %s22, 1
    %p290 = por %p288, %p289
    %p292 = scmp.ne.s32.totalorder %s275, %s291
    %p293 = scmp.eq.s32.totalorder %s22, 0
    %p294 = por %p292, %p293
    %p295 = scmp.le.s32.totalorder 1, %s16
    %p296 = scmp.lt.s32.totalorder %s16, 3
    %p297 = pnand %p295, %p296
    %p298 = pneg %p297
    // Predicated region
    $region9: #{multihead_attention.1} parent=5 // pred_check
      _
    $region10: #{multihead_attention.1} parent=5 // pred_check_branch
      %300 = sbr.rel (%p297) target = $region12
    $region11: #{multihead_attention.1} parent=5 // pred_region
      %s301 = ssub.s32 %s16, 1
      // Predicated region
      $region13: #{multihead_attention.1} parent=11 // pred_check
        %p302 = pneg %p112
      $region14: #{multihead_attention.1} parent=11 // pred_check_branch
        %304 = sbr.rel (%p302) target = $region16
      $region15: #{multihead_attention.1} parent=11 // pred_region
        _
      $region16: #{multihead_attention.1} parent=11 // pred_fallthru
        _
      // Predicated region
      $region17: #{multihead_attention.1} parent=11 // pred_check
        %p305 = pneg %p133
      $region18: #{multihead_attention.1} parent=11 // pred_check_branch
        %307 = sbr.rel (%p305) target = $region20
      $region19: #{multihead_attention.1} parent=11 // pred_region
        _
      $region20: #{multihead_attention.1} parent=11 // pred_fallthru
        _
      // Predicated region
      $region21: #{multihead_attention.1} parent=11 // pred_check
        %p308 = pneg %p154
      $region22: #{multihead_attention.1} parent=11 // pred_check_branch
        %310 = sbr.rel (%p308) target = $region24
      $region23: #{multihead_attention.1} parent=11 // pred_region
        _
      $region24: #{multihead_attention.1} parent=11 // pred_fallthru
        _
      // Predicated region
      $region25: #{multihead_attention.1} parent=11 // pred_check
        %p311 = pneg %p175
      $region26: #{multihead_attention.1} parent=11 // pred_check_branch
        %313 = sbr.rel (%p311) target = $region28
      $region27: #{multihead_attention.1} parent=11 // pred_region
        _
      $region28: #{multihead_attention.1} parent=11 // pred_fallthru
        _
      // Predicated region
      $region29: #{multihead_attention.1} parent=11 // pred_check
        %p314 = pneg %p196
      $region30: #{multihead_attention.1} parent=11 // pred_check_branch
        %316 = sbr.rel (%p314) target = $region32
      $region31: #{multihead_attention.1} parent=11 // pred_region
        _
      $region32: #{multihead_attention.1} parent=11 // pred_fallthru
        _
      // Predicated region
      $region33: #{multihead_attention.1} parent=11 // pred_check
        %p317 = pneg %p217
      $region34: #{multihead_attention.1} parent=11 // pred_check_branch
        %319 = sbr.rel (%p317) target = $region36
      $region35: #{multihead_attention.1} parent=11 // pred_region
        _
      $region36: #{multihead_attention.1} parent=11 // pred_fallthru
        _
      // Predicated region
      $region37: #{multihead_attention.1} parent=11 // pred_check
        %p320 = pneg %p238
      $region38: #{multihead_attention.1} parent=11 // pred_check_branch
        %322 = sbr.rel (%p320) target = $region40
      $region39: #{multihead_attention.1} parent=11 // pred_region
        _
      $region40: #{multihead_attention.1} parent=11 // pred_fallthru
        _
      // Predicated region
      $region41: #{multihead_attention.1} parent=11 // pred_check
        %p323 = pneg %p259
      $region42: #{multihead_attention.1} parent=11 // pred_check_branch
        %325 = sbr.rel (%p323) target = $region44
      $region43: #{multihead_attention.1} parent=11 // pred_region
        _
      $region44: #{multihead_attention.1} parent=11 // pred_fallthru
        _
    $region12: #{multihead_attention.1} parent=5 // pred_fallthru
      _
    %p326 = scmp.lt.s32.totalorder %s16, 2
    // Predicated region
    $region45: #{multihead_attention.1} parent=5 // pred_check
      %p327 = pneg %p326
    $region46: #{multihead_attention.1} parent=5 // pred_check_branch
      %329 = sbr.rel (%p327) target = $region48
    $region47: #{multihead_attention.1} parent=5 // pred_region
      // Predicated region
      $region49: #{multihead_attention.1} parent=47 // pred_check
        %p330 = pneg %p57
      $region50: #{multihead_attention.1} parent=47 // pred_check_branch
        %332 = sbr.rel (%p330) target = $region52
      $region51: #{multihead_attention.1} parent=47 // pred_region
        %p333 = scmp.lt.s32.totalorder %s23, 1
        %s334 = scalar_select %p333, %s23, 1
        %p335 = scmp.lt.s32.totalorder %s24, 0
        %s336 = scalar_select %p335, %s24, 0
        %s337 = sadd.s32 %s336, %s334
        %s338 = smul.addr %s337, 4
        %s339 = scalar_lea.vmem %s0, %s338
      $region52: #{multihead_attention.1} parent=47 // pred_fallthru
        _
      // Predicated region
      $region53: #{multihead_attention.1} parent=47 // pred_check
        %p340 = pneg %p85
      $region54: #{multihead_attention.1} parent=47 // pred_check_branch
        %342 = sbr.rel (%p340) target = $region56
      $region55: #{multihead_attention.1} parent=47 // pred_region
        %p343 = scmp.lt.s32.totalorder %s23, 1
        %s344 = scalar_select %p343, %s23, 1
        %p345 = scmp.lt.s32.totalorder %s25, 0
        %s346 = scalar_select %p345, %s25, 0
        %s347 = sadd.s32 %s346, %s344
        %s348 = smul.addr %s347, 4
        %s349 = scalar_lea.vmem %s1, %s348
      $region56: #{multihead_attention.1} parent=47 // pred_fallthru
        _
    $region48: #{multihead_attention.1} parent=5 // pred_fallthru
      _
    %p350 = scmp.le.s32.totalorder 1, %s16
    %p351 = scmp.lt.s32.totalorder %s16, 3
    %p352 = pnand %p350, %p351
    %p353 = pneg %p352
    // Predicated region
    $region57: #{multihead_attention.1} parent=5 // pred_check
      _
    $region58: #{multihead_attention.1} parent=5 // pred_check_branch
      %355 = sbr.rel (%p352) target = $region60
    $region59: #{multihead_attention.1} parent=5 // pred_region
      %s356 = ssub.s32 %s16, 1
      %p357 = scmp.lt.s32.totalorder %s26, 1
      %s358 = scalar_select %p357, %s26, 1
      %p359 = scmp.lt.s32.totalorder %s27, 0
      %s360 = scalar_select %p359, %s27, 0
      %s361 = sadd.s32 %s360, %s358
      %s362 = smul.addr %s361, 4
      %s363 = scalar_lea.vmem %s0, %s362
      %p364 = pneg %p63
      %p365 = pneg %p60
      %p366 = scmp.lt.s32.totalorder %s26, 1
      %s367 = scalar_select %p366, %s26, 1
      %p368 = scmp.lt.s32.totalorder %s28, 0
      %s369 = scalar_select %p368, %s28, 0
      %s370 = sadd.s32 %s369, %s367
      %s371 = smul.addr %s370, 4
      %s372 = scalar_lea.vmem %s1, %s371
      %p373 = pneg %p91
      %p374 = pneg %p88
      %p375 = pneg %p112
      %p376 = pneg %p109
      %p377 = pneg %p133
      %p378 = pneg %p130
      %p379 = pneg %p154
      %p380 = pneg %p151
      %p381 = pneg %p175
      %p382 = pneg %p172
      %p383 = pneg %p196
      %p384 = pneg %p193
      %p385 = pneg %p217
      %p386 = pneg %p214
      %p387 = pneg %p238
      %p388 = pneg %p235
      %p389 = pneg %p259
      %p390 = pneg %p256
      %p391 = pneg %p287
      %p392 = pneg %p284
      %p393 = scmp.lt.s32.totalorder %s26, 1
      %s394 = scalar_select %p393, %s26, 1
      %p395 = scmp.lt.s32.totalorder %s27, 0
      %s396 = scalar_select %p395, %s27, 0
      %s397 = sadd.s32 %s396, %s394
      %s398 = smul.addr %s397, 8
      %s399 = scalar_lea.vmem %s10, %s398
      %p400 = scmp.lt.s32.totalorder %s26, 1
      %s401 = scalar_select %p400, %s26, 1
      %p402 = scmp.lt.s32.totalorder %s27, 0
      %s403 = scalar_select %p402, %s27, 0
      %s404 = sadd.s32 %s403, %s401
      %s405 = smul.addr %s404, 4
      %s406 = scalar_lea.vmem %s0, %s405
      %p407 = scmp.lt.s32.totalorder %s26, 1
      %s408 = scalar_select %p407, %s26, 1
      %p409 = scmp.lt.s32.totalorder %s28, 0
      %s410 = scalar_select %p409, %s28, 0
      %s411 = sadd.s32 %s410, %s408
      %s412 = smul.addr %s411, 4
      %s413 = scalar_lea.vmem %s1, %s412
      %p414 = scmp.lt.s32.totalorder %s26, 1
      %s415 = scalar_select %p414, %s26, 1
      %p416 = scmp.lt.s32.totalorder %s27, 0
      %s417 = scalar_select %p416, %s27, 0
      %s418 = sadd.s32 %s417, %s415
      %s419 = smul.addr %s418, 8
      %s420 = scalar_lea.vmem %s10, %s419
      %p422 = scmp.eq.s32.totalorder %s28, 0
      // Predicated region
      $region61: #{multihead_attention.1} parent=59 // pred_check
        %p423 = pneg %p422
      $region62: #{multihead_attention.1} parent=59 // pred_check_branch
        %425 = sbr.rel (%p423) target = $region64
      $region63: #{multihead_attention.1} parent=59 // pred_region
        %v426 = vld [vmem:[%s406] sm:$0xf]
        %v427 = vld [vmem:[%s2] sm:$0xf]
        %v428 = vld [vmem:[%s2 + $0x4] sm:$0xf]
        %v429 = vld [vmem:[%s2 + $0x8] sm:$0xf]
        %v430 = vld [vmem:[%s2 + $0xc] sm:$0xf]
        %v431 = vld [vmem:[%s2 + $0x10] sm:$0xf]
        %v432 = vld [vmem:[%s2 + $0x14] sm:$0xf]
        %v433 = vld [vmem:[%s2 + $0x18] sm:$0xf]
        %v434 = vld [vmem:[%s2 + $0x1c] sm:$0xf]
        %v435 = vld [vmem:[%s2 + $0x20] sm:$0xf]
        %v436 = vld [vmem:[%s2 + $0x24] sm:$0xf]
        %v437 = vld [vmem:[%s2 + $0x28] sm:$0xf]
        %v438 = vld [vmem:[%s2 + $0x2c] sm:$0xf]
        %v439 = vld [vmem:[%s2 + $0x30] sm:$0xf]
        %v440 = vld [vmem:[%s2 + $0x34] sm:$0xf]
        %v441 = vld [vmem:[%s2 + $0x38] sm:$0xf]
        %v442 = vld [vmem:[%s2 + $0x3c] sm:$0xf]
        %v443 = vld [vmem:[%s5] sm:$0x1]
        %v445 = vlaneseq
        %v446 = vshrl.u32 %v445, 7
        %v447 = vsub.s32 0, %v446
        %v448 = vrot.slane %v443, %v447
        %v466 = vunpack.c.l.b16 %v427
        %v467 = vunpack.c.l.b16 %v428
        %v468 = vunpack.c.l.b16 %v429
        %v469 = vunpack.c.l.b16 %v430
        %v470 = vunpack.c.l.b16 %v431
        %v471 = vunpack.c.l.b16 %v432
        %v472 = vunpack.c.l.b16 %v433
        %v473 = vunpack.c.l.b16 %v434
        %v474 = vunpack.c.l.b16 %v435
        %v475 = vunpack.c.l.b16 %v436
        %v476 = vunpack.c.l.b16 %v437
        %v477 = vunpack.c.l.b16 %v438
        %v478 = vunpack.c.l.b16 %v439
        %v479 = vunpack.c.l.b16 %v440
        %v480 = vunpack.c.l.b16 %v441
        %v481 = vunpack.c.l.b16 %v442
        %v482 = vpack.c.b16 %v467, %v466
        %v483 = vpack.c.b16 %v469, %v468
        %v484 = vpack.c.b16 %v471, %v470
        %v485 = vpack.c.b16 %v473, %v472
        %v486 = vpack.c.b16 %v475, %v474
        %v487 = vpack.c.b16 %v477, %v476
        %v488 = vpack.c.b16 %v479, %v478
        %v489 = vpack.c.b16 %v481, %v480
        %498 = vmatprep.subr.bf16.mxu0 0
        %499 = vmatpush1.bf16.xpose.msra.mxu0 %v482
        %500 = vmatprep.subr.bf16.mxu0 0
        %501 = vmatpush1.bf16.xpose.msra.mxu0 %v483
        %502 = vmatprep.subr.bf16.mxu0 0
        %503 = vmatpush1.bf16.xpose.msra.mxu0 %v484
        %504 = vmatprep.subr.bf16.mxu0 0
        %505 = vmatpush1.bf16.xpose.msra.mxu0 %v485
        %506 = vmatprep.subr.bf16.mxu0 0
        %507 = vmatpush1.bf16.xpose.msra.mxu0 %v486
        %508 = vmatprep.subr.bf16.mxu0 0
        %509 = vmatpush1.bf16.xpose.msra.mxu0 %v487
        %510 = vmatprep.subr.bf16.mxu0 0
        %511 = vmatpush1.bf16.xpose.msra.mxu0 %v488
        %512 = vmatprep.subr.bf16.mxu0 0
        %513 = vmatpush1.bf16.xpose.msra.mxu0 %v489
        %514 = vmatprep.subr.bf16.mxu0 0
        %515 = vmatpush1.bf16.xpose.msra.mxu0 0
        %516 = vmatprep.subr.bf16.mxu0 0
        %517 = vmatpush1.bf16.xpose.msra.mxu0 0
        %518 = vmatprep.subr.bf16.mxu0 0
        %519 = vmatpush1.bf16.xpose.msra.mxu0 0
        %520 = vmatprep.subr.bf16.mxu0 0
        %521 = vmatpush1.bf16.xpose.msra.mxu0 0
        %522 = vmatprep.subr.bf16.mxu0 0
        %523 = vmatpush1.bf16.xpose.msra.mxu0 0
        %524 = vmatprep.subr.bf16.mxu0 0
        %525 = vmatpush1.bf16.xpose.msra.mxu0 0
        %526 = vmatprep.subr.bf16.mxu0 0
        %527 = vmatpush1.bf16.xpose.msra.mxu0 0
        %528 = vmatprep.subr.bf16.mxu0 0
        %529 = vmatpush1.bf16.xpose.msra.mxu0 0
        %530 = vmatprep.mubr.bf16.mxu0 0
        %531 = vmatmul.mubr.bf16.gmra.mrb[0].mxu0 %v426
        %v532 = vpop.f32.mrb[0].mxu0
        %v533 = vadd.f32 %v448, %v532
        %v534 = vpop.f32.mrb[0].mxu0
        %v535 = vpop.f32.mrb[0].mxu0
        %v536 = vpop.f32.mrb[0].mxu0
        %537 = vdwg.mxu0
        %v538 = vmul.f32 %v533, 0.35355338
        %v539 = vpack.c.bf16 %v538, %v538
        %540 = vst [vmem:[#allocation2] sm:$0xf] %v539
        %vm541 = vcmask 7168
        %542 = vst.msk [vmem:[#allocation3] sm:$0xff] %vm541, -inf
        %543 = vst.msk [vmem:[#allocation3 + $0x8] sm:$0xff] %vm541, -inf
        %544 = vst.msk [vmem:[#allocation3 + $0x10] sm:$0xff] %vm541, -inf
        %545 = vst.msk [vmem:[#allocation3 + $0x18] sm:$0xff] %vm541, -inf
        %546 = vst.msk [vmem:[#allocation4] sm:$0xff] %vm541, 0.0
        %547 = vst.msk [vmem:[#allocation4 + $0x8] sm:$0xff] %vm541, 0.0
        %548 = vst.msk [vmem:[#allocation4 + $0x10] sm:$0xff] %vm541, 0.0
        %549 = vst.msk [vmem:[#allocation4 + $0x18] sm:$0xff] %vm541, 0.0
        %vm550 = vcmask 64512
        %551 = vst.msk [vmem:[#allocation5] sm:$0xff] %vm550, 0.0
        %552 = vst.msk [vmem:[#allocation5 + $0x8] sm:$0xff] %vm550, 0.0
        %553 = vst.msk [vmem:[#allocation5 + $0x10] sm:$0xff] %vm550, 0.0
        %554 = vst.msk [vmem:[#allocation5 + $0x18] sm:$0xff] %vm550, 0.0
      $region64: #{multihead_attention.1} parent=59 // pred_fallthru
        _
      %v555 = vld [vmem:[%s413] sm:$0xf]
      %v556 = vld [vmem:[%s3] sm:$0xf]
      %v557 = vld [vmem:[%s3 + $0x4] sm:$0xf]
      %v558 = vld [vmem:[%s3 + $0x8] sm:$0xf]
      %v559 = vld [vmem:[%s3 + $0xc] sm:$0xf]
      %v560 = vld [vmem:[%s3 + $0x10] sm:$0xf]
      %v561 = vld [vmem:[%s3 + $0x14] sm:$0xf]
      %v562 = vld [vmem:[%s3 + $0x18] sm:$0xf]
      %v563 = vld [vmem:[%s3 + $0x1c] sm:$0xf]
      %v564 = vld [vmem:[%s3 + $0x20] sm:$0xf]
      %v565 = vld [vmem:[%s3 + $0x24] sm:$0xf]
      %v566 = vld [vmem:[%s3 + $0x28] sm:$0xf]
      %v567 = vld [vmem:[%s3 + $0x2c] sm:$0xf]
      %v568 = vld [vmem:[%s3 + $0x30] sm:$0xf]
      %v569 = vld [vmem:[%s3 + $0x34] sm:$0xf]
      %v570 = vld [vmem:[%s3 + $0x38] sm:$0xf]
      %v571 = vld [vmem:[%s3 + $0x3c] sm:$0xf]
      %v572 = vld [vmem:[%s6] sm:$0x1]
      %v574 = vlaneseq
      %v575 = vshrl.u32 %v574, 7
      %v576 = vsub.s32 0, %v575
      %v577 = vrot.slane %v572, %v576
      %v595 = vunpack.c.l.b16 %v556
      %v596 = vunpack.c.l.b16 %v557
      %v597 = vunpack.c.l.b16 %v558
      %v598 = vunpack.c.l.b16 %v559
      %v599 = vunpack.c.l.b16 %v560
      %v600 = vunpack.c.l.b16 %v561
      %v601 = vunpack.c.l.b16 %v562
      %v602 = vunpack.c.l.b16 %v563
      %v603 = vunpack.c.l.b16 %v564
      %v604 = vunpack.c.l.b16 %v565
      %v605 = vunpack.c.l.b16 %v566
      %v606 = vunpack.c.l.b16 %v567
      %v607 = vunpack.c.l.b16 %v568
      %v608 = vunpack.c.l.b16 %v569
      %v609 = vunpack.c.l.b16 %v570
      %v610 = vunpack.c.l.b16 %v571
      %v611 = vpack.c.b16 %v596, %v595
      %v612 = vpack.c.b16 %v598, %v597
      %v613 = vpack.c.b16 %v600, %v599
      %v614 = vpack.c.b16 %v602, %v601
      %v615 = vpack.c.b16 %v604, %v603
      %v616 = vpack.c.b16 %v606, %v605
      %v617 = vpack.c.b16 %v608, %v607
      %v618 = vpack.c.b16 %v610, %v609
      %627 = vmatprep.subr.bf16.mxu0 0
      %628 = vmatpush1.bf16.xpose.msra.mxu0 %v611
      %629 = vmatprep.subr.bf16.mxu0 0
      %630 = vmatpush1.bf16.xpose.msra.mxu0 %v612
      %631 = vmatprep.subr.bf16.mxu0 0
      %632 = vmatpush1.bf16.xpose.msra.mxu0 %v613
      %633 = vmatprep.subr.bf16.mxu0 0
      %634 = vmatpush1.bf16.xpose.msra.mxu0 %v614
      %635 = vmatprep.subr.bf16.mxu0 0
      %636 = vmatpush1.bf16.xpose.msra.mxu0 %v615
      %637 = vmatprep.subr.bf16.mxu0 0
      %638 = vmatpush1.bf16.xpose.msra.mxu0 %v616
      %639 = vmatprep.subr.bf16.mxu0 0
      %640 = vmatpush1.bf16.xpose.msra.mxu0 %v617
      %641 = vmatprep.subr.bf16.mxu0 0
      %642 = vmatpush1.bf16.xpose.msra.mxu0 %v618
      %643 = vmatprep.subr.bf16.mxu0 0
      %644 = vmatpush1.bf16.xpose.msra.mxu0 0
      %645 = vmatprep.subr.bf16.mxu0 0
      %646 = vmatpush1.bf16.xpose.msra.mxu0 0
      %647 = vmatprep.subr.bf16.mxu0 0
      %648 = vmatpush1.bf16.xpose.msra.mxu0 0
      %649 = vmatprep.subr.bf16.mxu0 0
      %650 = vmatpush1.bf16.xpose.msra.mxu0 0
      %651 = vmatprep.subr.bf16.mxu0 0
      %652 = vmatpush1.bf16.xpose.msra.mxu0 0
      %653 = vmatprep.subr.bf16.mxu0 0
      %654 = vmatpush1.bf16.xpose.msra.mxu0 0
      %655 = vmatprep.subr.bf16.mxu0 0
      %656 = vmatpush1.bf16.xpose.msra.mxu0 0
      %657 = vmatprep.subr.bf16.mxu0 0
      %658 = vmatpush1.bf16.xpose.msra.mxu0 0
      %659 = vmatprep.mubr.bf16.mxu0 0
      %660 = vmatmul.mubr.bf16.gmra.mrb[0].mxu0 %v555
      %v661 = vpop.f32.mrb[0].mxu0
      %v662 = vadd.f32 %v577, %v661
      %v663 = vpop.f32.mrb[0].mxu0
      %v664 = vpop.f32.mrb[0].mxu0
      %v665 = vpop.f32.mrb[0].mxu0
      %666 = vdwg.mxu0
      %v667 = vpack.c.bf16 %v662, %v662
      %v668 = vld [vmem:[%s4] sm:$0xf]
      %v669 = vld [vmem:[%s4 + $0x4] sm:$0xf]
      %v670 = vld [vmem:[%s4 + $0x8] sm:$0xf]
      %v671 = vld [vmem:[%s4 + $0xc] sm:$0xf]
      %v672 = vld [vmem:[%s4 + $0x10] sm:$0xf]
      %v673 = vld [vmem:[%s4 + $0x14] sm:$0xf]
      %v674 = vld [vmem:[%s4 + $0x18] sm:$0xf]
      %v675 = vld [vmem:[%s4 + $0x1c] sm:$0xf]
      %v676 = vld [vmem:[%s4 + $0x20] sm:$0xf]
      %v677 = vld [vmem:[%s4 + $0x24] sm:$0xf]
      %v678 = vld [vmem:[%s4 + $0x28] sm:$0xf]
      %v679 = vld [vmem:[%s4 + $0x2c] sm:$0xf]
      %v680 = vld [vmem:[%s4 + $0x30] sm:$0xf]
      %v681 = vld [vmem:[%s4 + $0x34] sm:$0xf]
      %v682 = vld [vmem:[%s4 + $0x38] sm:$0xf]
      %v683 = vld [vmem:[%s4 + $0x3c] sm:$0xf]
      %v684 = vld [vmem:[%s7] sm:$0x1]
      %v686 = vlaneseq
      %v687 = vshrl.u32 %v686, 7
      %v688 = vsub.s32 0, %v687
      %v689 = vrot.slane %v684, %v688
      %v707 = vunpack.c.l.b16 %v668
      %v708 = vunpack.c.l.b16 %v669
      %v709 = vunpack.c.l.b16 %v670
      %v710 = vunpack.c.l.b16 %v671
      %v711 = vunpack.c.l.b16 %v672
      %v712 = vunpack.c.l.b16 %v673
      %v713 = vunpack.c.l.b16 %v674
      %v714 = vunpack.c.l.b16 %v675
      %v715 = vunpack.c.l.b16 %v676
      %v716 = vunpack.c.l.b16 %v677
      %v717 = vunpack.c.l.b16 %v678
      %v718 = vunpack.c.l.b16 %v679
      %v719 = vunpack.c.l.b16 %v680
      %v720 = vunpack.c.l.b16 %v681
      %v721 = vunpack.c.l.b16 %v682
      %v722 = vunpack.c.l.b16 %v683
      %v723 = vpack.c.b16 %v708, %v707
      %v724 = vpack.c.b16 %v710, %v709
      %v725 = vpack.c.b16 %v712, %v711
      %v726 = vpack.c.b16 %v714, %v713
      %v727 = vpack.c.b16 %v716, %v715
      %v728 = vpack.c.b16 %v718, %v717
      %v729 = vpack.c.b16 %v720, %v719
      %v730 = vpack.c.b16 %v722, %v721
      %739 = vmatprep.subr.bf16.mxu0 0
      %740 = vmatpush1.bf16.xpose.msra.mxu0 %v723
      %741 = vmatprep.subr.bf16.mxu0 0
      %742 = vmatpush1.bf16.xpose.msra.mxu0 %v724
      %743 = vmatprep.subr.bf16.mxu0 0
      %744 = vmatpush1.bf16.xpose.msra.mxu0 %v725
      %745 = vmatprep.subr.bf16.mxu0 0
      %746 = vmatpush1.bf16.xpose.msra.mxu0 %v726
      %747 = vmatprep.subr.bf16.mxu0 0
      %748 = vmatpush1.bf16.xpose.msra.mxu0 %v727
      %749 = vmatprep.subr.bf16.mxu0 0
      %750 = vmatpush1.bf16.xpose.msra.mxu0 %v728
      %751 = vmatprep.subr.bf16.mxu0 0
      %752 = vmatpush1.bf16.xpose.msra.mxu0 %v729
      %753 = vmatprep.subr.bf16.mxu0 0
      %754 = vmatpush1.bf16.xpose.msra.mxu0 %v730
      %755 = vmatprep.subr.bf16.mxu0 0
      %756 = vmatpush1.bf16.xpose.msra.mxu0 0
      %757 = vmatprep.subr.bf16.mxu0 0
      %758 = vmatpush1.bf16.xpose.msra.mxu0 0
      %759 = vmatprep.subr.bf16.mxu0 0
      %760 = vmatpush1.bf16.xpose.msra.mxu0 0
      %761 = vmatprep.subr.bf16.mxu0 0
      %762 = vmatpush1.bf16.xpose.msra.mxu0 0
      %763 = vmatprep.subr.bf16.mxu0 0
      %764 = vmatpush1.bf16.xpose.msra.mxu0 0
      %765 = vmatprep.subr.bf16.mxu0 0
      %766 = vmatpush1.bf16.xpose.msra.mxu0 0
      %767 = vmatprep.subr.bf16.mxu0 0
      %768 = vmatpush1.bf16.xpose.msra.mxu0 0
      %769 = vmatprep.subr.bf16.mxu0 0
      %770 = vmatpush1.bf16.xpose.msra.mxu0 0
      %771 = vmatprep.mubr.bf16.mxu0 0
      %772 = vmatmul.mubr.bf16.gmra.mrb[0].mxu0 %v555
      %v773 = vpop.f32.mrb[0].mxu0
      %v774 = vadd.f32 %v689, %v773
      %v775 = vpop.f32.mrb[0].mxu0
      %v776 = vpop.f32.mrb[0].mxu0
      %v777 = vpop.f32.mrb[0].mxu0
      %778 = vdwg.mxu0
      %v779 = vpack.c.bf16 %v774, %v774
      %v780 = vld [vmem:[#allocation2] sm:$0xf]
      %vm781 = vcmask 64512
      %v783 = vsel %vm781, %v780, 0
      %v786 = vsel %vm781, %v667, 0
      %788 = vmatprep.subr.bf16.mxu0 0
      %789 = vmatpush1.bf16.xpose.msra.mxu0 %v786
      %790 = vmatprep.subr.bf16.mxu0 0
      %791 = vmatpush1.bf16.xpose.msra.mxu0 0
      %792 = vmatprep.subr.bf16.mxu0 0
      %793 = vmatpush1.bf16.xpose.msra.mxu0 0
      %794 = vmatprep.subr.bf16.mxu0 0
      %795 = vmatpush1.bf16.xpose.msra.mxu0 0
      %796 = vmatprep.subr.bf16.mxu0 0
      %797 = vmatpush1.bf16.xpose.msra.mxu0 0
      %798 = vmatprep.subr.bf16.mxu0 0
      %799 = vmatpush1.bf16.xpose.msra.mxu0 0
      %800 = vmatprep.subr.bf16.mxu0 0
      %801 = vmatpush1.bf16.xpose.msra.mxu0 0
      %802 = vmatprep.subr.bf16.mxu0 0
      %803 = vmatpush1.bf16.xpose.msra.mxu0 0
      %804 = vmatprep.subr.bf16.mxu0 0
      %805 = vmatpush1.bf16.xpose.msra.mxu0 0
      %806 = vmatprep.subr.bf16.mxu0 0
      %807 = vmatpush1.bf16.xpose.msra.mxu0 0
      %808 = vmatprep.subr.bf16.mxu0 0
      %809 = vmatpush1.bf16.xpose.msra.mxu0 0
      %810 = vmatprep.subr.bf16.mxu0 0
      %811 = vmatpush1.bf16.xpose.msra.mxu0 0
      %812 = vmatprep.subr.bf16.mxu0 0
      %813 = vmatpush1.bf16.xpose.msra.mxu0 0
      %814 = vmatprep.subr.bf16.mxu0 0
      %815 = vmatpush1.bf16.xpose.msra.mxu0 0
      %816 = vmatprep.subr.bf16.mxu0 0
      %817 = vmatpush1.bf16.xpose.msra.mxu0 0
      %818 = vmatprep.subr.bf16.mxu0 0
      %819 = vmatpush1.bf16.xpose.msra.mxu0 0
      %820 = vmatprep.mubr.bf16.mxu0 0
      %821 = vmatmul.mubr.bf16.gmra.mrb[0].mxu0 %v783
      %v822 = vpop.f32.mrb[0].mxu0
      %v823 = vadd.f32 0.0, %v822
      %v824 = vpop.f32.mrb[0].mxu0
      %v825 = vpop.f32.mrb[0].mxu0
      %v826 = vpop.f32.mrb[0].mxu0
      %827 = vdwg.mxu0
      %v828 = vld [vmem:[#allocation3] sm:$0xff]
      %v829 = vsel %vm781, %v823, -inf
      %830 = vmax.xlane.f32.xlu0 %v829
      %v831 = vpop.xlane.xlu0 %830
      %v832 = vmax.f32 %v828, %v831
      %v833 = vsub.f32 %v828, %v832
      %v834 = vmul.f32 %v833, 1.442695
      %v835 = vpow.pop %v834
      %837 = vset.pattern.permute.xlu0 0
      %838 = vperm.xlu0 %837, %v832
      %v839 = vpop.permute.xlu0 %838
      %v841 = vsub.f32 %v823, %v839
      %v842 = vmul.f32 %v841, 1.442695
      %v843 = vpow.pop %v842
      %v844 = vld [vmem:[#allocation4] sm:$0xff]
      %v845 = vmul.f32 %v835, %v844
      %v846 = vsel %vm781, %v843, 0.0
      %847 = vadd.xlane.f32.xlu0 %v846
      %v848 = vpop.xlane.xlu0 %847
      %v849 = vadd.f32 %v845, %v848
      %vm850 = vcmask 7168
      %851 = vst.msk [vmem:[#allocation4] sm:$0xff] %vm850, %v849
      %v852 = vld [vmem:[#allocation5] sm:$0xff]
      %854 = vset.pattern.permute.xlu0 0
      %855 = vperm.xlu0 %854, %v835
      %v856 = vpop.permute.xlu0 %855
      %v858 = vmul.f32 %v856, %v852
      %v859 = vpack.c.bf16 %v843, %v843
      %v861 = vsel %vm781, %v859, 0
      %vm863 = vcmask 1043456
      %v865 = vsel %vm863, %v779, 0
      %867 = vmatprep.subr.bf16.mxu0 0
      %868 = vmatpush1.bf16.msra.mxu0 %v865
      %869 = vmatprep.subr.bf16.mxu0 0
      %870 = vmatpush1.bf16.msra.mxu0 0
      %871 = vmatprep.subr.bf16.mxu0 0
      %872 = vmatpush1.bf16.msra.mxu0 0
      %873 = vmatprep.subr.bf16.mxu0 0
      %874 = vmatpush1.bf16.msra.mxu0 0
      %875 = vmatprep.subr.bf16.mxu0 0
      %876 = vmatpush1.bf16.msra.mxu0 0
      %877 = vmatprep.subr.bf16.mxu0 0
      %878 = vmatpush1.bf16.msra.mxu0 0
      %879 = vmatprep.subr.bf16.mxu0 0
      %880 = vmatpush1.bf16.msra.mxu0 0
      %881 = vmatprep.subr.bf16.mxu0 0
      %882 = vmatpush1.bf16.msra.mxu0 0
      %883 = vmatprep.subr.bf16.mxu0 0
      %884 = vmatpush1.bf16.msra.mxu0 0
      %885 = vmatprep.subr.bf16.mxu0 0
      %886 = vmatpush1.bf16.msra.mxu0 0
      %887 = vmatprep.subr.bf16.mxu0 0
      %888 = vmatpush1.bf16.msra.mxu0 0
      %889 = vmatprep.subr.bf16.mxu0 0
      %890 = vmatpush1.bf16.msra.mxu0 0
      %891 = vmatprep.subr.bf16.mxu0 0
      %892 = vmatpush1.bf16.msra.mxu0 0
      %893 = vmatprep.subr.bf16.mxu0 0
      %894 = vmatpush1.bf16.msra.mxu0 0
      %895 = vmatprep.subr.bf16.mxu0 0
      %896 = vmatpush1.bf16.msra.mxu0 0
      %897 = vmatprep.subr.bf16.mxu0 0
      %898 = vmatpush1.bf16.msra.mxu0 0
      %899 = vmatprep.mubr.bf16.mxu0 0
      %900 = vmatmul.mubr.bf16.gmra.mrb[0].mxu0 %v861
      %v901 = vpop.f32.mrb[0].mxu0
      %v902 = vadd.f32 0.0, %v901
      %v903 = vpop.f32.mrb[0].mxu0
      %v904 = vpop.f32.mrb[0].mxu0
      %v905 = vpop.f32.mrb[0].mxu0
      %906 = vdwg.mxu0
      %v907 = vadd.f32 %v858, %v902
      %908 = vst.msk [vmem:[#allocation5] sm:$0xff] %vm781, %v907
      %909 = vst.msk [vmem:[#allocation3] sm:$0xff] %vm850, %v832
      %v910 = vld [vmem:[#allocation2] sm:$0xf]
      %v912 = vunpack.c.l.b16 %v910
      %v913 = vpack.c.b16 %v912, %v912
      %914 = vrot.lane.b32.xlu0 %v913, 120
      %v915 = vpop.permute.xlu0 %914
      %917 = vrot.lane.b32.xlu0 %v667, 120
      %v918 = vpop.permute.xlu0 %917
      %v920 = vsel %vm781, %v915, 0
      %v923 = vsel %vm781, %v918, 0
      %925 = vmatprep.subr.bf16.mxu0 0
      %926 = vmatpush1.bf16.xpose.msra.mxu0 %v923
      %927 = vmatprep.subr.bf16.mxu0 0
      %928 = vmatpush1.bf16.xpose.msra.mxu0 0
      %929 = vmatprep.subr.bf16.mxu0 0
      %930 = vmatpush1.bf16.xpose.msra.mxu0 0
      %931 = vmatprep.subr.bf16.mxu0 0
      %932 = vmatpush1.bf16.xpose.msra.mxu0 0
      %933 = vmatprep.subr.bf16.mxu0 0
      %934 = vmatpush1.bf16.xpose.msra.mxu0 0
      %935 = vmatprep.subr.bf16.mxu0 0
      %936 = vmatpush1.bf16.xpose.msra.mxu0 0
      %937 = vmatprep.subr.bf16.mxu0 0
      %938 = vmatpush1.bf16.xpose.msra.mxu0 0
      %939 = vmatprep.subr.bf16.mxu0 0
      %940 = vmatpush1.bf16.xpose.msra.mxu0 0
      %941 = vmatprep.subr.bf16.mxu0 0
      %942 = vmatpush1.bf16.xpose.msra.mxu0 0
      %943 = vmatprep.subr.bf16.mxu0 0
      %944 = vmatpush1.bf16.xpose.msra.mxu0 0
      %945 = vmatprep.subr.bf16.mxu0 0
      %946 = vmatpush1.bf16.xpose.msra.mxu0 0
      %947 = vmatprep.subr.bf16.mxu0 0
      %948 = vmatpush1.bf16.xpose.msra.mxu0 0
      %949 = vmatprep.subr.bf16.mxu0 0
      %950 = vmatpush1.bf16.xpose.msra.mxu0 0
      %951 = vmatprep.subr.bf16.mxu0 0
      %952 = vmatpush1.bf16.xpose.msra.mxu0 0
      %953 = vmatprep.subr.bf16.mxu0 0
      %954 = vmatpush1.bf16.xpose.msra.mxu0 0
      %955 = vmatprep.subr.bf16.mxu0 0
      %956 = vmatpush1.bf16.xpose.msra.mxu0 0
      %957 = vmatprep.mubr.bf16.mxu0 0
      %958 = vmatmul.mubr.bf16.gmra.mrb[0].mxu0 %v920
      %v959 = vpop.f32.mrb[0].mxu0
      %v960 = vadd.f32 0.0, %v959
      %v961 = vpop.f32.mrb[0].mxu0
      %v962 = vpop.f32.mrb[0].mxu0
      %v963 = vpop.f32.mrb[0].mxu0
      %964 = vdwg.mxu0
      %s965 = scalar_lea.vmem [#allocation3], 8
      %v966 = vld [vmem:[%s965] sm:$0xff]
      %v967 = vsel %vm781, %v960, -inf
      %968 = vmax.xlane.f32.xlu0 %v967
      %v969 = vpop.xlane.xlu0 %968
      %v970 = vmax.f32 %v966, %v969
      %v971 = vsub.f32 %v966, %v970
      %v972 = vmul.f32 %v971, 1.442695
      %v973 = vpow.pop %v972
      %975 = vset.pattern.permute.xlu0 0
      %976 = vperm.xlu0 %975, %v970
      %v977 = vpop.permute.xlu0 %976
      %v979 = vsub.f32 %v960, %v977
      %v980 = vmul.f32 %v979, 1.442695
      %v981 = vpow.pop %v980
      %s982 = scalar_lea.vmem [#allocation4], 8
      %v983 = vld [vmem:[%s982] sm:$0xff]
      %v984 = vmul.f32 %v973, %v983
      %v985 = vsel %vm781, %v981, 0.0
      %986 = vadd.xlane.f32.xlu0 %v985
      %v987 = vpop.xlane.xlu0 %986
      %v988 = vadd.f32 %v984, %v987
      %989 = vst.msk [vmem:[%s982] sm:$0xff] %vm850, %v988
      %s990 = scalar_lea.vmem [#allocation5], 8
      %v991 = vld [vmem:[%s990] sm:$0xff]
      %993 = vset.pattern.permute.xlu0 0
      %994 = vperm.xlu0 %993, %v973
      %v995 = vpop.permute.xlu0 %994
      %v997 = vmul.f32 %v995, %v991
      %v998 = vpack.c.bf16 %v981, %v981
      %1000 = vrot.lane.b32.xlu0 %v779, 120
      %v1001 = vpop.permute.xlu0 %1000
      %v1003 = vsel %vm781, %v998, 0
      %v1006 = vsel %vm863, %v1001, 0
      %1008 = vmatprep.subr.bf16.mxu0 0
      %1009 = vmatpush1.bf16.msra.mxu0 %v1006
      %1010 = vmatprep.subr.bf16.mxu0 0
      %1011 = vmatpush1.bf16.msra.mxu0 0
      %1012 = vmatprep.subr.bf16.mxu0 0
      %1013 = vmatpush1.bf16.msra.mxu0 0
      %1014 = vmatprep.subr.bf16.mxu0 0
      %1015 = vmatpush1.bf16.msra.mxu0 0
      %1016 = vmatprep.subr.bf16.mxu0 0
      %1017 = vmatpush1.bf16.msra.mxu0 0
      %1018 = vmatprep.subr.bf16.mxu0 0
      %1019 = vmatpush1.bf16.msra.mxu0 0
      %1020 = vmatprep.subr.bf16.mxu0 0
      %1021 = vmatpush1.bf16.msra.mxu0 0
      %1022 = vmatprep.subr.bf16.mxu0 0
      %1023 = vmatpush1.bf16.msra.mxu0 0
      %1024 = vmatprep.subr.bf16.mxu0 0
      %1025 = vmatpush1.bf16.msra.mxu0 0
      %1026 = vmatprep.subr.bf16.mxu0 0
      %1027 = vmatpush1.bf16.msra.mxu0 0
      %1028 = vmatprep.subr.bf16.mxu0 0
      %1029 = vmatpush1.bf16.msra.mxu0 0
      %1030 = vmatprep.subr.bf16.mxu0 0
      %1031 = vmatpush1.bf16.msra.mxu0 0
      %1032 = vmatprep.subr.bf16.mxu0 0
      %1033 = vmatpush1.bf16.msra.mxu0 0
      %1034 = vmatprep.subr.bf16.mxu0 0
      %1035 = vmatpush1.bf16.msra.mxu0 0
      %1036 = vmatprep.subr.bf16.mxu0 0
      %1037 = vmatpush1.bf16.msra.mxu0 0
      %1038 = vmatprep.subr.bf16.mxu0 0
      %1039 = vmatpush1.bf16.msra.mxu0 0
      %1040 = vmatprep.mubr.bf16.mxu0 0
      %1041 = vmatmul.mubr.bf16.gmra.mrb[0].mxu0 %v1003
      %v1042 = vpop.f32.mrb[0].mxu0
      %v1043 = vadd.f32 0.0, %v1042
      %v1044 = vpop.f32.mrb[0].mxu0
      %v1045 = vpop.f32.mrb[0].mxu0
      %v1046 = vpop.f32.mrb[0].mxu0
      %1047 = vdwg.mxu0
      %v1048 = vadd.f32 %v997, %v1043
      %1049 = vst.msk [vmem:[%s990] sm:$0xff] %vm781, %v1048
      %1050 = vst.msk [vmem:[%s965] sm:$0xff] %vm850, %v970
      %v1051 = vld [vmem:[#allocation2] sm:$0xf]
      %v1053 = vunpack.c.l.b16 %v1051
      %v1054 = vpack.c.b16 %v1053, %v1053
      %1055 = vrot.lane.b32.xlu0 %v1054, 112
      %v1056 = vpop.permute.xlu0 %1055
      %1057 = vrot.lane.b32.xlu0 %v667, 112
      %v1058 = vpop.permute.xlu0 %1057
      %v1060 = vsel %vm781, %v1056, 0
      %v1063 = vsel %vm781, %v1058, 0
      %1065 = vmatprep.subr.bf16.mxu0 0
      %1066 = vmatpush1.bf16.xpose.msra.mxu0 %v1063
      %1067 = vmatprep.subr.bf16.mxu0 0
      %1068 = vmatpush1.bf16.xpose.msra.mxu0 0
      %1069 = vmatprep.subr.bf16.mxu0 0
      %1070 = vmatpush1.bf16.xpose.msra.mxu0 0
      %1071 = vmatprep.subr.bf16.mxu0 0
      %1072 = vmatpush1.bf16.xpose.msra.mxu0 0
      %1073 = vmatprep.subr.bf16.mxu0 0
      %1074 = vmatpush1.bf16.xpose.msra.mxu0 0
      %1075 = vmatprep.subr.bf16.mxu0 0
      %1076 = vmatpush1.bf16.xpose.msra.mxu0 0
      %1077 = vmatprep.subr.bf16.mxu0 0
      %1078 = vmatpush1.bf16.xpose.msra.mxu0 0
      %1079 = vmatprep.subr.bf16.mxu0 0
      %1080 = vmatpush1.bf16.xpose.msra.mxu0 0
      %1081 = vmatprep.subr.bf16.mxu0 0
      %1082 = vmatpush1.bf16.xpose.msra.mxu0 0
      %1083 = vmatprep.subr.bf16.mxu0 0
      %1084 = vmatpush1.bf16.xpose.msra.mxu0 0
      %1085 = vmatprep.subr.bf16.mxu0 0
      %1086 = vmatpush1.bf16.xpose.msra.mxu0 0
      %1087 = vmatprep.subr.bf16.mxu0 0
      %1088 = vmatpush1.bf16.xpose.msra.mxu0 0
      %1089 = vmatprep.subr.bf16.mxu0 0
      %1090 = vmatpush1.bf16.xpose.msra.mxu0 0
      %1091 = vmatprep.subr.bf16.mxu0 0
      %1092 = vmatpush1.bf16.xpose.msra.mxu0 0
      %1093 = vmatprep.subr.bf16.mxu0 0
      %1094 = vmatpush1.bf16.xpose.msra.mxu0 0
      %1095 = vmatprep.subr.bf16.mxu0 0
      %1096 = vmatpush1.bf16.xpose.msra.mxu0 0
      %1097 = vmatprep.mubr.bf16.mxu0 0
      %1098 = vmatmul.mubr.bf16.gmra.mrb[0].mxu0 %v1060
      %v1099 = vpop.f32.mrb[0].mxu0
      %v1100 = vadd.f32 0.0, %v1099
      %v1101 = vpop.f32.mrb[0].mxu0
      %v1102 = vpop.f32.mrb[0].mxu0
      %v1103 = vpop.f32.mrb[0].mxu0
      %1104 = vdwg.mxu0
      %s1105 = scalar_lea.vmem [#allocation3], 16
      %v1106 = vld [vmem:[%s1105] sm:$0xff]
      %v1107 = vsel %vm781, %v1100, -inf
      %1108 = vmax.xlane.f32.xlu0 %v1107
      %v1109 = vpop.xlane.xlu0 %1108
      %v1110 = vmax.f32 %v1106, %v1109
      %v1111 = vsub.f32 %v1106, %v1110
      %v1112 = vmul.f32 %v1111, 1.442695
      %v1113 = vpow.pop %v1112
      %1115 = vset.pattern.permute.xlu0 0
      %1116 = vperm.xlu0 %1115, %v1110
      %v1117 = vpop.permute.xlu0 %1116
      %v1119 = vsub.f32 %v1100, %v1117
      %v1120 = vmul.f32 %v1119, 1.442695
      %v1121 = vpow.pop %v1120
      %s1122 = scalar_lea.vmem [#allocation4], 16
      %v1123 = vld [vmem:[%s1122] sm:$0xff]
      %v1124 = vmul.f32 %v1113, %v1123
      %v1125 = vsel %vm781, %v1121, 0.0
      %1126 = vadd.xlane.f32.xlu0 %v1125
      %v1127 = vpop.xlane.xlu0 %1126
      %v1128 = vadd.f32 %v1124, %v1127
      %1129 = vst.msk [vmem:[%s1122] sm:$0xff] %vm850, %v1128
      %s1130 = scalar_lea.vmem [#allocation5], 16
      %v1131 = vld [vmem:[%s1130] sm:$0xff]
      %1133 = vset.pattern.permute.xlu0 0
      %1134 = vperm.xlu0 %1133, %v1113
      %v1135 = vpop.permute.xlu0 %1134
      %v1137 = vmul.f32 %v1135, %v1131
      %v1138 = vpack.c.bf16 %v1121, %v1121
      %1139 = vrot.lane.b32.xlu0 %v779, 112
      %v1140 = vpop.permute.xlu0 %1139
      %v1142 = vsel %vm781, %v1138, 0
      %v1145 = vsel %vm863, %v1140, 0
      %1147 = vmatprep.subr.bf16.mxu0 0
      %1148 = vmatpush1.bf16.msra.mxu0 %v1145
      %1149 = vmatprep.subr.bf16.mxu0 0
      %1150 = vmatpush1.bf16.msra.mxu0 0
      %1151 = vmatprep.subr.bf16.mxu0 0
      %1152 = vmatpush1.bf16.msra.mxu0 0
      %1153 = vmatprep.subr.bf16.mxu0 0
      %1154 = vmatpush1.bf16.msra.mxu0 0
      %1155 = vmatprep.subr.bf16.mxu0 0
      %1156 = vmatpush1.bf16.msra.mxu0 0
      %1157 = vmatprep.subr.bf16.mxu0 0
      %1158 = vmatpush1.bf16.msra.mxu0 0
      %1159 = vmatprep.subr.bf16.mxu0 0
      %1160 = vmatpush1.bf16.msra.mxu0 0
      %1161 = vmatprep.subr.bf16.mxu0 0
      %1162 = vmatpush1.bf16.msra.mxu0 0
      %1163 = vmatprep.subr.bf16.mxu0 0
      %1164 = vmatpush1.bf16.msra.mxu0 0
      %1165 = vmatprep.subr.bf16.mxu0 0
      %1166 = vmatpush1.bf16.msra.mxu0 0
      %1167 = vmatprep.subr.bf16.mxu0 0
      %1168 = vmatpush1.bf16.msra.mxu0 0
      %1169 = vmatprep.subr.bf16.mxu0 0
      %1170 = vmatpush1.bf16.msra.mxu0 0
      %1171 = vmatprep.subr.bf16.mxu0 0
      %1172 = vmatpush1.bf16.msra.mxu0 0
      %1173 = vmatprep.subr.bf16.mxu0 0
      %1174 = vmatpush1.bf16.msra.mxu0 0
      %1175 = vmatprep.subr.bf16.mxu0 0
      %1176 = vmatpush1.bf16.msra.mxu0 0
      %1177 = vmatprep.subr.bf16.mxu0 0
      %1178 = vmatpush1.bf16.msra.mxu0 0
      %1179 = vmatprep.mubr.bf16.mxu0 0
      %1180 = vmatmul.mubr.bf16.gmra.mrb[0].mxu0 %v1142
      %v1181 = vpop.f32.mrb[0].mxu0
      %v1182 = vadd.f32 0.0, %v1181
      %v1183 = vpop.f32.mrb[0].mxu0
      %v1184 = vpop.f32.mrb[0].mxu0
      %v1185 = vpop.f32.mrb[0].mxu0
      %1186 = vdwg.mxu0
      %v1187 = vadd.f32 %v1137, %v1182
      %1188 = vst.msk [vmem:[%s1130] sm:$0xff] %vm781, %v1187
      %1189 = vst.msk [vmem:[%s1105] sm:$0xff] %vm850, %v1110
      %v1190 = vld [vmem:[#allocation2] sm:$0xf]
      %v1192 = vunpack.c.l.b16 %v1190
      %v1193 = vpack.c.b16 %v1192, %v1192
      %1194 = vrot.lane.b32.xlu0 %v1193, 104
      %v1195 = vpop.permute.xlu0 %1194
      %1196 = vrot.lane.b32.xlu0 %v667, 104
      %v1197 = vpop.permute.xlu0 %1196
      %v1199 = vsel %vm781, %v1195, 0
      %v1202 = vsel %vm781, %v1197, 0
      %1204 = vmatprep.subr.bf16.mxu0 0
      %1205 = vmatpush1.bf16.xpose.msra.mxu0 %v1202
      %1206 = vmatprep.subr.bf16.mxu0 0
      %1207 = vmatpush1.bf16.xpose.msra.mxu0 0
      %1208 = vmatprep.subr.bf16.mxu0 0
      %1209 = vmatpush1.bf16.xpose.msra.mxu0 0
      %1210 = vmatprep.subr.bf16.mxu0 0
      %1211 = vmatpush1.bf16.xpose.msra.mxu0 0
      %1212 = vmatprep.subr.bf16.mxu0 0
      %1213 = vmatpush1.bf16.xpose.msra.mxu0 0
      %1214 = vmatprep.subr.bf16.mxu0 0
      %1215 = vmatpush1.bf16.xpose.msra.mxu0 0
      %1216 = vmatprep.subr.bf16.mxu0 0
      %1217 = vmatpush1.bf16.xpose.msra.mxu0 0
      %1218 = vmatprep.subr.bf16.mxu0 0
      %1219 = vmatpush1.bf16.xpose.msra.mxu0 0
      %1220 = vmatprep.subr.bf16.mxu0 0
      %1221 = vmatpush1.bf16.xpose.msra.mxu0 0
      %1222 = vmatprep.subr.bf16.mxu0 0
      %1223 = vmatpush1.bf16.xpose.msra.mxu0 0
      %1224 = vmatprep.subr.bf16.mxu0 0
      %1225 = vmatpush1.bf16.xpose.msra.mxu0 0
      %1226 = vmatprep.subr.bf16.mxu0 0
      %1227 = vmatpush1.bf16.xpose.msra.mxu0 0
      %1228 = vmatprep.subr.bf16.mxu0 0
      %1229 = vmatpush1.bf16.xpose.msra.mxu0 0
      %1230 = vmatprep.subr.bf16.mxu0 0
      %1231 = vmatpush1.bf16.xpose.msra.mxu0 0
      %1232 = vmatprep.subr.bf16.mxu0 0
      %1233 = vmatpush1.bf16.xpose.msra.mxu0 0
      %1234 = vmatprep.subr.bf16.mxu0 0
      %1235 = vmatpush1.bf16.xpose.msra.mxu0 0
      %1236 = vmatprep.mubr.bf16.mxu0 0
      %1237 = vmatmul.mubr.bf16.gmra.mrb[0].mxu0 %v1199
      %v1238 = vpop.f32.mrb[0].mxu0
      %v1239 = vadd.f32 0.0, %v1238
      %v1240 = vpop.f32.mrb[0].mxu0
      %v1241 = vpop.f32.mrb[0].mxu0
      %v1242 = vpop.f32.mrb[0].mxu0
      %1243 = vdwg.mxu0
      %s1244 = scalar_lea.vmem [#allocation3], 24
      %v1245 = vld [vmem:[%s1244] sm:$0xff]
      %v1246 = vsel %vm781, %v1239, -inf
      %1247 = vmax.xlane.f32.xlu0 %v1246
      %v1248 = vpop.xlane.xlu0 %1247
      %v1249 = vmax.f32 %v1245, %v1248
      %v1250 = vsub.f32 %v1245, %v1249
      %v1251 = vmul.f32 %v1250, 1.442695
      %v1252 = vpow.pop %v1251
      %1254 = vset.pattern.permute.xlu0 0
      %1255 = vperm.xlu0 %1254, %v1249
      %v1256 = vpop.permute.xlu0 %1255
      %v1258 = vsub.f32 %v1239, %v1256
      %v1259 = vmul.f32 %v1258, 1.442695
      %v1260 = vpow.pop %v1259
      %s1261 = scalar_lea.vmem [#allocation4], 24
      %v1262 = vld [vmem:[%s1261] sm:$0xff]
      %v1263 = vmul.f32 %v1252, %v1262
      %v1264 = vsel %vm781, %v1260, 0.0
      %1265 = vadd.xlane.f32.xlu0 %v1264
      %v1266 = vpop.xlane.xlu0 %1265
      %v1267 = vadd.f32 %v1263, %v1266
      %1268 = vst.msk [vmem:[%s1261] sm:$0xff] %vm850, %v1267
      %s1269 = scalar_lea.vmem [#allocation5], 24
      %v1270 = vld [vmem:[%s1269] sm:$0xff]
      %1272 = vset.pattern.permute.xlu0 0
      %1273 = vperm.xlu0 %1272, %v1252
      %v1274 = vpop.permute.xlu0 %1273
      %v1276 = vmul.f32 %v1274, %v1270
      %v1277 = vpack.c.bf16 %v1260, %v1260
      %1278 = vrot.lane.b32.xlu0 %v779, 104
      %v1279 = vpop.permute.xlu0 %1278
      %v1281 = vsel %vm781, %v1277, 0
      %v1284 = vsel %vm863, %v1279, 0
      %1286 = vmatprep.subr.bf16.mxu0 0
      %1287 = vmatpush1.bf16.msra.mxu0 %v1284
      %1288 = vmatprep.subr.bf16.mxu0 0
      %1289 = vmatpush1.bf16.msra.mxu0 0
      %1290 = vmatprep.subr.bf16.mxu0 0
      %1291 = vmatpush1.bf16.msra.mxu0 0
      %1292 = vmatprep.subr.bf16.mxu0 0
      %1293 = vmatpush1.bf16.msra.mxu0 0
      %1294 = vmatprep.subr.bf16.mxu0 0
      %1295 = vmatpush1.bf16.msra.mxu0 0
      %1296 = vmatprep.subr.bf16.mxu0 0
      %1297 = vmatpush1.bf16.msra.mxu0 0
      %1298 = vmatprep.subr.bf16.mxu0 0
      %1299 = vmatpush1.bf16.msra.mxu0 0
      %1300 = vmatprep.subr.bf16.mxu0 0
      %1301 = vmatpush1.bf16.msra.mxu0 0
      %1302 = vmatprep.subr.bf16.mxu0 0
      %1303 = vmatpush1.bf16.msra.mxu0 0
      %1304 = vmatprep.subr.bf16.mxu0 0
      %1305 = vmatpush1.bf16.msra.mxu0 0
      %1306 = vmatprep.subr.bf16.mxu0 0
      %1307 = vmatpush1.bf16.msra.mxu0 0
      %1308 = vmatprep.subr.bf16.mxu0 0
      %1309 = vmatpush1.bf16.msra.mxu0 0
      %1310 = vmatprep.subr.bf16.mxu0 0
      %1311 = vmatpush1.bf16.msra.mxu0 0
      %1312 = vmatprep.subr.bf16.mxu0 0
      %1313 = vmatpush1.bf16.msra.mxu0 0
      %1314 = vmatprep.subr.bf16.mxu0 0
      %1315 = vmatpush1.bf16.msra.mxu0 0
      %1316 = vmatprep.subr.bf16.mxu0 0
      %1317 = vmatpush1.bf16.msra.mxu0 0
      %1318 = vmatprep.mubr.bf16.mxu0 0
      %1319 = vmatmul.mubr.bf16.gmra.mrb[0].mxu0 %v1281
      %v1320 = vpop.f32.mrb[0].mxu0
      %v1321 = vadd.f32 0.0, %v1320
      %v1322 = vpop.f32.mrb[0].mxu0
      %v1323 = vpop.f32.mrb[0].mxu0
      %v1324 = vpop.f32.mrb[0].mxu0
      %1325 = vdwg.mxu0
      %v1326 = vadd.f32 %v1276, %v1321
      %1327 = vst.msk [vmem:[%s1269] sm:$0xff] %vm781, %v1326
      %1328 = vst.msk [vmem:[%s1244] sm:$0xff] %vm850, %v1249
      // Predicated region
      $region65: #{multihead_attention.1} parent=59 // pred_check
        %p1329 = pneg %p422
      $region66: #{multihead_attention.1} parent=59 // pred_check_branch
        %1331 = sbr.rel (%p1329) target = $region68
      $region67: #{multihead_attention.1} parent=59 // pred_region
        %v1332 = vld [vmem:[#allocation5] sm:$0xff]
        %v1333 = vld [vmem:[#allocation4] sm:$0xff]
        %1335 = vset.pattern.permute.xlu0 0
        %1336 = vperm.xlu0 %1335, %v1333
        %v1337 = vpop.permute.xlu0 %1336
        %v1339 = vrcp.pop %v1337
        %v1340 = vmul.f32 %v1332, %v1339
        %v1341 = vpack.c.bf16 %v1340, %v1340
        %v1342 = vld [vmem:[%s8] sm:$0xf]
        %v1343 = vld [vmem:[%s8 + $0x4] sm:$0xf]
        %v1344 = vld [vmem:[%s8 + $0x8] sm:$0xf]
        %v1345 = vld [vmem:[%s8 + $0xc] sm:$0xf]
        %v1346 = vld [vmem:[%s8 + $0x10] sm:$0xf]
        %v1347 = vld [vmem:[%s8 + $0x14] sm:$0xf]
        %v1348 = vld [vmem:[%s8 + $0x18] sm:$0xf]
        %v1349 = vld [vmem:[%s8 + $0x1c] sm:$0xf]
        %v1350 = vld [vmem:[%s8 + $0x20] sm:$0xf]
        %v1351 = vld [vmem:[%s8 + $0x24] sm:$0xf]
        %v1352 = vld [vmem:[%s8 + $0x28] sm:$0xf]
        %v1353 = vld [vmem:[%s8 + $0x2c] sm:$0xf]
        %v1354 = vld [vmem:[%s8 + $0x30] sm:$0xf]
        %v1355 = vld [vmem:[%s8 + $0x34] sm:$0xf]
        %v1356 = vld [vmem:[%s8 + $0x38] sm:$0xf]
        %v1357 = vld [vmem:[%s8 + $0x3c] sm:$0xf]
        %v1358 = vld [vmem:[%s990] sm:$0xff]
        %v1359 = vld [vmem:[%s982] sm:$0xff]
        %1361 = vset.pattern.permute.xlu0 0
        %1362 = vperm.xlu0 %1361, %v1359
        %v1363 = vpop.permute.xlu0 %1362
        %v1365 = vrcp.pop %v1363
        %v1366 = vmul.f32 %v1358, %v1365
        %v1367 = vpack.c.bf16 %v1366, %v1366
        %v1384 = vunpack.c.l.b16 %v1342
        %v1385 = vunpack.c.l.b16 %v1343
        %v1386 = vunpack.c.l.b16 %v1344
        %v1387 = vunpack.c.l.b16 %v1345
        %v1388 = vunpack.c.l.b16 %v1346
        %v1389 = vunpack.c.l.b16 %v1347
        %v1390 = vunpack.c.l.b16 %v1348
        %v1391 = vunpack.c.l.b16 %v1349
        %v1392 = vunpack.c.l.b16 %v1350
        %v1393 = vunpack.c.l.b16 %v1351
        %v1394 = vunpack.c.l.b16 %v1352
        %v1395 = vunpack.c.l.b16 %v1353
        %v1396 = vunpack.c.l.b16 %v1354
        %v1397 = vunpack.c.l.b16 %v1355
        %v1398 = vunpack.c.l.b16 %v1356
        %v1399 = vunpack.c.l.b16 %v1357
        %v1400 = vpack.c.b16 %v1385, %v1384
        %v1401 = vpack.c.b16 %v1387, %v1386
        %v1402 = vpack.c.b16 %v1389, %v1388
        %v1403 = vpack.c.b16 %v1391, %v1390
        %v1404 = vpack.c.b16 %v1393, %v1392
        %v1405 = vpack.c.b16 %v1395, %v1394
        %v1406 = vpack.c.b16 %v1397, %v1396
        %v1407 = vpack.c.b16 %v1399, %v1398
        %1408 = vrot.lane.b32.xlu0 %v1400, 120
        %v1409 = vpop.permute.xlu0 %1408
        %1410 = vrot.lane.b32.xlu0 %v1401, 120
        %v1411 = vpop.permute.xlu0 %1410
        %1412 = vrot.lane.b32.xlu0 %v1402, 120
        %v1413 = vpop.permute.xlu0 %1412
        %1414 = vrot.lane.b32.xlu0 %v1403, 120
        %v1415 = vpop.permute.xlu0 %1414
        %1416 = vrot.lane.b32.xlu0 %v1404, 120
        %v1417 = vpop.permute.xlu0 %1416
        %1418 = vrot.lane.b32.xlu0 %v1405, 120
        %v1419 = vpop.permute.xlu0 %1418
        %1420 = vrot.lane.b32.xlu0 %v1406, 120
        %v1421 = vpop.permute.xlu0 %1420
        %1422 = vrot.lane.b32.xlu0 %v1407, 120
        %v1423 = vpop.permute.xlu0 %1422
        %v1425 = vsel %vm781, %v1367, 0
        %v1428 = vsel %vm781, %v1409, 0
        %v1431 = vsel %vm781, %v1411, 0
        %v1434 = vsel %vm781, %v1413, 0
        %v1437 = vsel %vm781, %v1415, 0
        %v1440 = vsel %vm781, %v1417, 0
        %v1443 = vsel %vm781, %v1419, 0
        %v1446 = vsel %vm781, %v1421, 0
        %v1449 = vsel %vm781, %v1423, 0
        %1451 = vmatprep.subr.bf16.mxu0 0
        %1452 = vmatpush1.bf16.xpose.msra.mxu0 %v1428
        %1453 = vmatprep.subr.bf16.mxu0 0
        %1454 = vmatpush1.bf16.xpose.msra.mxu0 %v1431
        %1455 = vmatprep.subr.bf16.mxu0 0
        %1456 = vmatpush1.bf16.xpose.msra.mxu0 %v1434
        %1457 = vmatprep.subr.bf16.mxu0 0
        %1458 = vmatpush1.bf16.xpose.msra.mxu0 %v1437
        %1459 = vmatprep.subr.bf16.mxu0 0
        %1460 = vmatpush1.bf16.xpose.msra.mxu0 %v1440
        %1461 = vmatprep.subr.bf16.mxu0 0
        %1462 = vmatpush1.bf16.xpose.msra.mxu0 %v1443
        %1463 = vmatprep.subr.bf16.mxu0 0
        %1464 = vmatpush1.bf16.xpose.msra.mxu0 %v1446
        %1465 = vmatprep.subr.bf16.mxu0 0
        %1466 = vmatpush1.bf16.xpose.msra.mxu0 %v1449
        %1467 = vmatprep.subr.bf16.mxu0 0
        %1468 = vmatpush1.bf16.xpose.msra.mxu0 0
        %1469 = vmatprep.subr.bf16.mxu0 0
        %1470 = vmatpush1.bf16.xpose.msra.mxu0 0
        %1471 = vmatprep.subr.bf16.mxu0 0
        %1472 = vmatpush1.bf16.xpose.msra.mxu0 0
        %1473 = vmatprep.subr.bf16.mxu0 0
        %1474 = vmatpush1.bf16.xpose.msra.mxu0 0
        %1475 = vmatprep.subr.bf16.mxu0 0
        %1476 = vmatpush1.bf16.xpose.msra.mxu0 0
        %1477 = vmatprep.subr.bf16.mxu0 0
        %1478 = vmatpush1.bf16.xpose.msra.mxu0 0
        %1479 = vmatprep.subr.bf16.mxu0 0
        %1480 = vmatpush1.bf16.xpose.msra.mxu0 0
        %1481 = vmatprep.subr.bf16.mxu0 0
        %1482 = vmatpush1.bf16.xpose.msra.mxu0 0
        %1483 = vmatprep.mubr.bf16.mxu0 0
        %1484 = vmatmul.mubr.bf16.gmra.mrb[0].mxu0 %v1425
        %v1485 = vpop.f32.mrb[0].mxu0
        %v1486 = vadd.f32 0.0, %v1485
        %v1487 = vpop.f32.mrb[0].mxu0
        %v1488 = vpop.f32.mrb[0].mxu0
        %v1489 = vpop.f32.mrb[0].mxu0
        %1490 = vdwg.mxu0
        %v1492 = vsel %vm781, %v1341, 0
        %v1495 = vsel %vm781, %v1400, 0
        %v1498 = vsel %vm781, %v1401, 0
        %v1501 = vsel %vm781, %v1402, 0
        %v1504 = vsel %vm781, %v1403, 0
        %v1507 = vsel %vm781, %v1404, 0
        %v1510 = vsel %vm781, %v1405, 0
        %v1513 = vsel %vm781, %v1406, 0
        %v1516 = vsel %vm781, %v1407, 0
        %1518 = vmatprep.subr.bf16.mxu0 0
        %1519 = vmatpush1.bf16.xpose.msra.mxu0 %v1495
        %1520 = vmatprep.subr.bf16.mxu0 0
        %1521 = vmatpush1.bf16.xpose.msra.mxu0 %v1498
        %1522 = vmatprep.subr.bf16.mxu0 0
        %1523 = vmatpush1.bf16.xpose.msra.mxu0 %v1501
        %1524 = vmatprep.subr.bf16.mxu0 0
        %1525 = vmatpush1.bf16.xpose.msra.mxu0 %v1504
        %1526 = vmatprep.subr.bf16.mxu0 0
        %1527 = vmatpush1.bf16.xpose.msra.mxu0 %v1507
        %1528 = vmatprep.subr.bf16.mxu0 0
        %1529 = vmatpush1.bf16.xpose.msra.mxu0 %v1510
        %1530 = vmatprep.subr.bf16.mxu0 0
        %1531 = vmatpush1.bf16.xpose.msra.mxu0 %v1513
        %1532 = vmatprep.subr.bf16.mxu0 0
        %1533 = vmatpush1.bf16.xpose.msra.mxu0 %v1516
        %1534 = vmatprep.subr.bf16.mxu0 0
        %1535 = vmatpush1.bf16.xpose.msra.mxu0 0
        %1536 = vmatprep.subr.bf16.mxu0 0
        %1537 = vmatpush1.bf16.xpose.msra.mxu0 0
        %1538 = vmatprep.subr.bf16.mxu0 0
        %1539 = vmatpush1.bf16.xpose.msra.mxu0 0
        %1540 = vmatprep.subr.bf16.mxu0 0
        %1541 = vmatpush1.bf16.xpose.msra.mxu0 0
        %1542 = vmatprep.subr.bf16.mxu0 0
        %1543 = vmatpush1.bf16.xpose.msra.mxu0 0
        %1544 = vmatprep.subr.bf16.mxu0 0
        %1545 = vmatpush1.bf16.xpose.msra.mxu0 0
        %1546 = vmatprep.subr.bf16.mxu0 0
        %1547 = vmatpush1.bf16.xpose.msra.mxu0 0
        %1548 = vmatprep.subr.bf16.mxu0 0
        %1549 = vmatpush1.bf16.xpose.msra.mxu0 0
        %1550 = vmatprep.mubr.bf16.mxu0 0
        %1551 = vmatmul.mubr.bf16.gmra.mrb[0].mxu0 %v1492
        %v1552 = vpop.f32.mrb[0].mxu0
        %v1553 = vadd.f32 %v1486, %v1552
        %v1554 = vpop.f32.mrb[0].mxu0
        %v1555 = vpop.f32.mrb[0].mxu0
        %v1556 = vpop.f32.mrb[0].mxu0
        %1557 = vdwg.mxu0
        %v1558 = vld [vmem:[%s1130] sm:$0xff]
        %v1559 = vld [vmem:[%s1122] sm:$0xff]
        %1561 = vset.pattern.permute.xlu0 0
        %1562 = vperm.xlu0 %1561, %v1559
        %v1563 = vpop.permute.xlu0 %1562
        %v1565 = vrcp.pop %v1563
        %v1566 = vmul.f32 %v1558, %v1565
        %v1567 = vpack.c.bf16 %v1566, %v1566
        %1568 = vrot.lane.b32.xlu0 %v1400, 112
        %v1569 = vpop.permute.xlu0 %1568
        %1570 = vrot.lane.b32.xlu0 %v1401, 112
        %v1571 = vpop.permute.xlu0 %1570
        %1572 = vrot.lane.b32.xlu0 %v1402, 112
        %v1573 = vpop.permute.xlu0 %1572
        %1574 = vrot.lane.b32.xlu0 %v1403, 112
        %v1575 = vpop.permute.xlu0 %1574
        %1576 = vrot.lane.b32.xlu0 %v1404, 112
        %v1577 = vpop.permute.xlu0 %1576
        %1578 = vrot.lane.b32.xlu0 %v1405, 112
        %v1579 = vpop.permute.xlu0 %1578
        %1580 = vrot.lane.b32.xlu0 %v1406, 112
        %v1581 = vpop.permute.xlu0 %1580
        %1582 = vrot.lane.b32.xlu0 %v1407, 112
        %v1583 = vpop.permute.xlu0 %1582
        %v1585 = vsel %vm781, %v1567, 0
        %v1588 = vsel %vm781, %v1569, 0
        %v1591 = vsel %vm781, %v1571, 0
        %v1594 = vsel %vm781, %v1573, 0
        %v1597 = vsel %vm781, %v1575, 0
        %v1600 = vsel %vm781, %v1577, 0
        %v1603 = vsel %vm781, %v1579, 0
        %v1606 = vsel %vm781, %v1581, 0
        %v1609 = vsel %vm781, %v1583, 0
        %1611 = vmatprep.subr.bf16.mxu0 0
        %1612 = vmatpush1.bf16.xpose.msra.mxu0 %v1588
        %1613 = vmatprep.subr.bf16.mxu0 0
        %1614 = vmatpush1.bf16.xpose.msra.mxu0 %v1591
        %1615 = vmatprep.subr.bf16.mxu0 0
        %1616 = vmatpush1.bf16.xpose.msra.mxu0 %v1594
        %1617 = vmatprep.subr.bf16.mxu0 0
        %1618 = vmatpush1.bf16.xpose.msra.mxu0 %v1597
        %1619 = vmatprep.subr.bf16.mxu0 0
        %1620 = vmatpush1.bf16.xpose.msra.mxu0 %v1600
        %1621 = vmatprep.subr.bf16.mxu0 0
        %1622 = vmatpush1.bf16.xpose.msra.mxu0 %v1603
        %1623 = vmatprep.subr.bf16.mxu0 0
        %1624 = vmatpush1.bf16.xpose.msra.mxu0 %v1606
        %1625 = vmatprep.subr.bf16.mxu0 0
        %1626 = vmatpush1.bf16.xpose.msra.mxu0 %v1609
        %1627 = vmatprep.subr.bf16.mxu0 0
        %1628 = vmatpush1.bf16.xpose.msra.mxu0 0
        %1629 = vmatprep.subr.bf16.mxu0 0
        %1630 = vmatpush1.bf16.xpose.msra.mxu0 0
        %1631 = vmatprep.subr.bf16.mxu0 0
        %1632 = vmatpush1.bf16.xpose.msra.mxu0 0
        %1633 = vmatprep.subr.bf16.mxu0 0
        %1634 = vmatpush1.bf16.xpose.msra.mxu0 0
        %1635 = vmatprep.subr.bf16.mxu0 0
        %1636 = vmatpush1.bf16.xpose.msra.mxu0 0
        %1637 = vmatprep.subr.bf16.mxu0 0
        %1638 = vmatpush1.bf16.xpose.msra.mxu0 0
        %1639 = vmatprep.subr.bf16.mxu0 0
        %1640 = vmatpush1.bf16.xpose.msra.mxu0 0
        %1641 = vmatprep.subr.bf16.mxu0 0
        %1642 = vmatpush1.bf16.xpose.msra.mxu0 0
        %1643 = vmatprep.mubr.bf16.mxu0 0
        %1644 = vmatmul.mubr.bf16.gmra.mrb[0].mxu0 %v1585
        %v1645 = vpop.f32.mrb[0].mxu0
        %v1646 = vadd.f32 0.0, %v1645
        %v1647 = vpop.f32.mrb[0].mxu0
        %v1648 = vpop.f32.mrb[0].mxu0
        %v1649 = vpop.f32.mrb[0].mxu0
        %1650 = vdwg.mxu0
        %v1651 = vadd.f32 %v1553, %v1646
        %v1652 = vld [vmem:[%s1269] sm:$0xff]
        %v1653 = vld [vmem:[%s1261] sm:$0xff]
        %1655 = vset.pattern.permute.xlu0 0
        %1656 = vperm.xlu0 %1655, %v1653
        %v1657 = vpop.permute.xlu0 %1656
        %v1659 = vrcp.pop %v1657
        %v1660 = vmul.f32 %v1652, %v1659
        %v1661 = vpack.c.bf16 %v1660, %v1660
        %1662 = vrot.lane.b32.xlu0 %v1400, 104
        %v1663 = vpop.permute.xlu0 %1662
        %1664 = vrot.lane.b32.xlu0 %v1401, 104
        %v1665 = vpop.permute.xlu0 %1664
        %1666 = vrot.lane.b32.xlu0 %v1402, 104
        %v1667 = vpop.permute.xlu0 %1666
        %1668 = vrot.lane.b32.xlu0 %v1403, 104
        %v1669 = vpop.permute.xlu0 %1668
        %1670 = vrot.lane.b32.xlu0 %v1404, 104
        %v1671 = vpop.permute.xlu0 %1670
        %1672 = vrot.lane.b32.xlu0 %v1405, 104
        %v1673 = vpop.permute.xlu0 %1672
        %1674 = vrot.lane.b32.xlu0 %v1406, 104
        %v1675 = vpop.permute.xlu0 %1674
        %1676 = vrot.lane.b32.xlu0 %v1407, 104
        %v1677 = vpop.permute.xlu0 %1676
        %v1679 = vsel %vm781, %v1661, 0
        %v1682 = vsel %vm781, %v1663, 0
        %v1685 = vsel %vm781, %v1665, 0
        %v1688 = vsel %vm781, %v1667, 0
        %v1691 = vsel %vm781, %v1669, 0
        %v1694 = vsel %vm781, %v1671, 0
        %v1697 = vsel %vm781, %v1673, 0
        %v1700 = vsel %vm781, %v1675, 0
        %v1703 = vsel %vm781, %v1677, 0
        %1705 = vmatprep.subr.bf16.mxu0 0
        %1706 = vmatpush1.bf16.xpose.msra.mxu0 %v1682
        %1707 = vmatprep.subr.bf16.mxu0 0
        %1708 = vmatpush1.bf16.xpose.msra.mxu0 %v1685
        %1709 = vmatprep.subr.bf16.mxu0 0
        %1710 = vmatpush1.bf16.xpose.msra.mxu0 %v1688
        %1711 = vmatprep.subr.bf16.mxu0 0
        %1712 = vmatpush1.bf16.xpose.msra.mxu0 %v1691
        %1713 = vmatprep.subr.bf16.mxu0 0
        %1714 = vmatpush1.bf16.xpose.msra.mxu0 %v1694
        %1715 = vmatprep.subr.bf16.mxu0 0
        %1716 = vmatpush1.bf16.xpose.msra.mxu0 %v1697
        %1717 = vmatprep.subr.bf16.mxu0 0
        %1718 = vmatpush1.bf16.xpose.msra.mxu0 %v1700
        %1719 = vmatprep.subr.bf16.mxu0 0
        %1720 = vmatpush1.bf16.xpose.msra.mxu0 %v1703
        %1721 = vmatprep.subr.bf16.mxu0 0
        %1722 = vmatpush1.bf16.xpose.msra.mxu0 0
        %1723 = vmatprep.subr.bf16.mxu0 0
        %1724 = vmatpush1.bf16.xpose.msra.mxu0 0
        %1725 = vmatprep.subr.bf16.mxu0 0
        %1726 = vmatpush1.bf16.xpose.msra.mxu0 0
        %1727 = vmatprep.subr.bf16.mxu0 0
        %1728 = vmatpush1.bf16.xpose.msra.mxu0 0
        %1729 = vmatprep.subr.bf16.mxu0 0
        %1730 = vmatpush1.bf16.xpose.msra.mxu0 0
        %1731 = vmatprep.subr.bf16.mxu0 0
        %1732 = vmatpush1.bf16.xpose.msra.mxu0 0
        %1733 = vmatprep.subr.bf16.mxu0 0
        %1734 = vmatpush1.bf16.xpose.msra.mxu0 0
        %1735 = vmatprep.subr.bf16.mxu0 0
        %1736 = vmatpush1.bf16.xpose.msra.mxu0 0
        %1737 = vmatprep.mubr.bf16.mxu0 0
        %1738 = vmatmul.mubr.bf16.gmra.mrb[0].mxu0 %v1679
        %v1739 = vpop.f32.mrb[0].mxu0
        %v1740 = vadd.f32 0.0, %v1739
        %v1741 = vpop.f32.mrb[0].mxu0
        %v1742 = vpop.f32.mrb[0].mxu0
        %v1743 = vpop.f32.mrb[0].mxu0
        %1744 = vdwg.mxu0
        %v1745 = vadd.f32 %v1651, %v1740
        %v1746 = vld [vmem:[%s9] sm:$0x1]
        %v1748 = vlaneseq
        %v1749 = vshrl.u32 %v1748, 7
        %v1750 = vsub.s32 0, %v1749
        %v1751 = vrot.slane %v1746, %v1750
        %v1753 = vadd.f32 %v1745, %v1751
        %1754 = vst [vmem:[%s420] sm:$0xff] %v1753
      $region68: #{multihead_attention.1} parent=59 // pred_fallthru
        _
      %p1755 = scmp.lt.s32.totalorder %s26, 1
      %s1756 = scalar_select %p1755, %s26, 1
      %p1757 = scmp.lt.s32.totalorder %s27, 0
      %s1758 = scalar_select %p1757, %s27, 0
      %s1759 = sadd.s32 %s1758, %s1756
      %s1760 = smul.addr %s1759, 8
      %s1761 = scalar_lea.vmem %s10, %s1760
      // Predicated region
      $region69: #{multihead_attention.1} parent=59 // pred_check
        %p1762 = pneg %p284
      $region70: #{multihead_attention.1} parent=59 // pred_check_branch
        %1764 = sbr.rel (%p1762) target = $region72
      $region71: #{multihead_attention.1} parent=59 // pred_region
        _
      $region72: #{multihead_attention.1} parent=59 // pred_fallthru
        _
    $region60: #{multihead_attention.1} parent=5 // pred_fallthru
      _
    %p1765 = scmp.le.s32.totalorder 2, %s16
    // Predicated region
    $region73: #{multihead_attention.1} parent=5 // pred_check
      %p1766 = pneg %p1765
    $region74: #{multihead_attention.1} parent=5 // pred_check_branch
      %1768 = sbr.rel (%p1766) target = $region76
    $region75: #{multihead_attention.1} parent=5 // pred_region
      %s1769 = ssub.s32 %s16, 2
      // Predicated region
      $region77: #{multihead_attention.1} parent=75 // pred_check
        %p1770 = pneg %p290
      $region78: #{multihead_attention.1} parent=75 // pred_check_branch
        %1772 = sbr.rel (%p1770) target = $region80
      $region79: #{multihead_attention.1} parent=75 // pred_region
        %p1773 = scmp.lt.s32.totalorder %s29, 1
        %s1774 = scalar_select %p1773, %s29, 1
        %p1775 = scmp.lt.s32.totalorder %s30, 0
        %s1776 = scalar_select %p1775, %s30, 0
        %s1777 = sadd.s32 %s1776, %s1774
        %s1778 = smul.addr %s1777, 8
        %s1779 = scalar_lea.vmem %s10, %s1778
      $region80: #{multihead_attention.1} parent=75 // pred_fallthru
        _
    $region76: #{multihead_attention.1} parent=5 // pred_fallthru
      _
  $region6: #{multihead_attention.1} parent=0 // loop_footer
    %s20 = sadd.s32 1, %s16
  $region7: #{multihead_attention.1} parent=0 // loop_footer_branch
    %15 = sbr.rel target = $region3
  $region8: #{multihead_attention.1} parent=0 // loop_exit
    _

</llo_original>
